<compile_context>
chip_gen: v5e
topology: v5e:2x2
jax: 0.10.0
libtpu: 0.0.40
codegen_flags: <defaults>
</compile_context>

<pallas_src>
import jax
import jax.numpy as jnp
import numpy as np
from jax.experimental import pallas as pl
from jax.experimental.pallas import tpu as pltpu


# ---------------------------------------------------------------------------
# host-side helpers (numpy / jnp, trace-time only)
# ---------------------------------------------------------------------------
def bilinear_matrix(out_size: int, in_size: int) -> np.ndarray:
    """U (out, in) so that U @ v == 1-D bilinear upsample, align_corners=True."""
    U = np.zeros((out_size, in_size), np.float32)
    if in_size == 1:
        U[:, 0] = 1.0
        return U
    scale = (in_size - 1) / (out_size - 1)
    for i in range(out_size):
        src = i * scale
        i0 = min(int(np.floor(src)), in_size - 1)
        i1 = min(i0 + 1, in_size - 1)
        f = src - i0
        U[i, i0] += 1.0 - f
        U[i, i1] += f
    return U


def upsample_pad_matrix(H, W, H2, W2) -> np.ndarray:
    """(H*W, H2*W2): flattened 2x bilinear upsample (align_corners=True)
    composed with the diffY/diffX zero pad, as one right-multiply matrix."""
    dY, dX = H2 - 2 * H, W2 - 2 * W
    assert dY >= 0 and dX >= 0, "x2 must be spatially >= 2*x1 (non-negative pad)"
    uh, uw = bilinear_matrix(2 * H, H), bilinear_matrix(2 * W, W)
    uhp = np.zeros((H2, H), np.float32)
    uwp = np.zeros((W2, W), np.float32)
    uhp[dY // 2: dY // 2 + 2 * H] = uh
    uwp[dX // 2: dX // 2 + 2 * W] = uw
    return np.kron(uhp, uwp).T.astype(np.float32)          # (H*W, H2*W2)


def tap_masks(H2, W2) -> np.ndarray:
    """(9, H2*W2) validity masks of the 3x3 taps on the flattened plane."""
    ys, xs = np.divmod(np.arange(H2 * W2), W2)
    m = np.zeros((9, H2 * W2), np.float32)
    for ky in range(3):
        for kx in range(3):
            dy, dx = ky - 1, kx - 1
            ok = ((ys + dy >= 0) & (ys + dy < H2)
                  & (xs + dx >= 0) & (xs + dx < W2))
            m[ky * 3 + kx] = ok.astype(np.float32)
    return m


def flatten_conv_weight(w_hwio, cpad):
    """HWIO (3,3,Cin,Cout) -> (Cout, 9*cpad), tap-major, Cin zero-padded so
    every tap occupies a full sublane-aligned block of the im2col scratch."""
    kh, kw, cin, cout = w_hwio.shape
    w = jnp.transpose(w_hwio, (3, 0, 1, 2)).reshape(cout, kh * kw, cin)
    w = jnp.pad(w, ((0, 0), (0, 0), (0, cpad - cin)))
    return w.reshape(cout, kh * kw * cpad).astype(jnp.float32)


def fold_bn(conv_bias, gamma, beta, rmean, rvar, eps=1e-5):
    """Fold conv bias + eval-mode BatchNorm into per-channel scale/bias."""
    s = gamma / jnp.sqrt(rvar + eps)
    b = (conv_bias - rmean) * s + beta
    return s, b


def _round_up(x, m):
    return -(-x // m) * m


def _pick_images_per_step(N, HW2, max_lanes=2048, min_grid_steps=1):
    """Largest divisor Nb of N s.t. Nb*HW2 <= max_lanes and N//Nb >= min_grid_steps.
    On v7x (2 TensorCores) call with min_grid_steps=2 so megacore sharding
    keeps both cores busy; on v5e/v6e (1 TC) fewer, fatter steps win."""
    best = 1
    for nb in range(1, N + 1):
        if N % nb:
            continue
        if nb * HW2 > max_lanes:
            continue
        if (N // nb) < min_grid_steps:
            continue
        best = nb
    return best


# ---------------------------------------------------------------------------
# fused Up.forward: one pallas_call per forward, Nb images per grid step
# ---------------------------------------------------------------------------
def up_forward(x1, x2, params, *, min_grid_steps=1):
    """x1: (N, c1, H, W), x2: (N, c2, H2, W2), NCHW float32.
    params: w1/w2 HWIO (3,3,Cin,Cout); s1/b1/s2/b2 folded BN scale/bias.
    Returns (N, Cout, H2, W2)."""
    N, c1, H, W = x1.shape
    N2, c2, H2, W2 = x2.shape
    assert N == N2
    HW, HW2 = H * W, H2 * W2
    cin1 = c1 + c2
    mid = params["w1"].shape[-1]
    cout = params["w2"].shape[-1]

    # separate per-conv channel padding (review: don't share one max CPAD)
    CPAD1 = _round_up(cin1, 8)
    CPAD2 = _round_up(mid, 8)
    CPADM = max(CPAD1, CPAD2)

    # lane batching: Nb images share the lane axis of one grid step
    Nb = _pick_images_per_step(N, HW2, min_grid_steps=min_grid_steps)
    S = N // Nb
    LANES = Nb * HW2
    # lane margin on each side of the canvas: tap offsets are in [-(W2+1), W2+1];
    # margin reads are always mask==0, margins just have to be finite (zeroed).
    M = _round_up(W2 + 1, 128)

    upmat = jnp.asarray(upsample_pad_matrix(H, W, H2, W2))        # (HW, HW2)
    m_np = np.tile(tap_masks(H2, W2), (1, Nb))                    # (9, LANES)
    maskb = jnp.asarray(np.repeat(m_np, CPADM, axis=0))           # (9*CPADM, LANES)

    w1f = flatten_conv_weight(params["w1"], CPAD1)                # (mid, 9*CPAD1)
    w2f = flatten_conv_weight(params["w2"], CPAD2)                # (cout, 9*CPAD2)
    s1 = params["s1"].reshape(mid, 1).astype(jnp.float32)
    b1 = params["b1"].reshape(mid, 1).astype(jnp.float32)
    s2 = params["s2"].reshape(cout, 1).astype(jnp.float32)
    b2 = params["b2"].reshape(cout, 1).astype(jnp.float32)

    # layout plumbing (host-side, cheap): flattened spatial -> lanes, with Nb
    # image planes concatenated along lanes inside each grid step.
    x1f = x1.reshape(N * c1, HW)                                  # (N*c1, HW)
    x2f = (x2.reshape(S, Nb, c2, HW2).transpose(0, 2, 1, 3)
             .reshape(S, c2, LANES))                              # (S, c2, LANES)

    def kernel(x1_ref, x2_ref, up_ref, mask_ref,
               w1_ref, s1_ref, b1_ref, w2_ref, s2_ref, b2_ref,
               o_ref, canvas_ref, patches_ref):

        def conv3x3_bn_relu(cpad, w_ref, s_ref, b_ref):
            # im2col: 9 static lane-slice reads of the margined canvas
            for ky in range(3):
                for kx in range(3):
                    t = ky * 3 + kx
                    off = (ky - 1) * W2 + (kx - 1)                # flattened tap shift
                    sh = canvas_ref[0:cpad, M + off:M + off + LANES]
                    if off == 0:
                        # center tap is always valid: skip the mask multiply
                        patches_ref[t * cpad:(t + 1) * cpad, :] = sh
                    else:
                        patches_ref[t * cpad:(t + 1) * cpad, :] = (
                            sh * mask_ref[t * CPADM:t * CPADM + cpad, :])
            acc = jnp.dot(w_ref[...], patches_ref[0:9 * cpad, :],  # one K=9*cpad matmul
                          preferred_element_type=jnp.float32)
            return jnp.maximum(acc * s_ref[...] + b_ref[...], 0.0)

        # zero the wrap margins (margin reads are masked to 0, but must be finite)
        canvas_ref[:, 0:M] = jnp.zeros((CPADM, M), jnp.float32)
        canvas_ref[:, M + LANES:2 * M + LANES] = jnp.zeros((CPADM, M), jnp.float32)

        # bilinear 2x upsample + diff pad of all Nb images: a single MXU matmul
        x1up = jnp.dot(x1_ref[...], up_ref[...],
                       preferred_element_type=jnp.float32)        # (Nb*c1, HW2)

        # channel concat [x2, x1up] directly in VMEM (channels on sublanes,
        # image i in lane segment i)
        canvas_ref[0:c2, M:M + LANES] = x2_ref[0]
        for i in range(Nb):
            canvas_ref[c2:cin1, M + i * HW2:M + (i + 1) * HW2] = (
                x1up[i * c1:(i + 1) * c1, :])
        if cin1 < CPAD1:
            canvas_ref[cin1:CPAD1, M:M + LANES] = jnp.zeros(
                (CPAD1 - cin1, LANES), jnp.float32)

        y1 = conv3x3_bn_relu(CPAD1, w1_ref, s1_ref, b1_ref)       # (mid, LANES)

        canvas_ref[0:mid, M:M + LANES] = y1
        if mid < CPAD2:
            canvas_ref[mid:CPAD2, M:M + LANES] = jnp.zeros(
                (CPAD2 - mid, LANES), jnp.float32)

        o_ref[0] = conv3x3_bn_relu(CPAD2, w2_ref, s2_ref, b2_ref)  # (cout, LANES)

    fixed2 = lambda s: (0, 0)
    out = pl.pallas_call(
        kernel,
        out_shape=jax.ShapeDtypeStruct((S, cout, LANES), jnp.float32),
        grid_spec=pltpu.PrefetchScalarGridSpec(
            num_scalar_prefetch=0,
            grid=(S,),
            in_specs=[
                pl.BlockSpec((Nb * c1, HW), lambda s: (s, 0)),
                pl.BlockSpec((1, c2, LANES), lambda s: (s, 0, 0)),
                pl.BlockSpec((HW, HW2), fixed2),
                pl.BlockSpec((9 * CPADM, LANES), fixed2),
                pl.BlockSpec((mid, 9 * CPAD1), fixed2),
                pl.BlockSpec((mid, 1), fixed2),
                pl.BlockSpec((mid, 1), fixed2),
                pl.BlockSpec((cout, 9 * CPAD2), fixed2),
                pl.BlockSpec((cout, 1), fixed2),
                pl.BlockSpec((cout, 1), fixed2),
            ],
            out_specs=pl.BlockSpec((1, cout, LANES), lambda s: (s, 0, 0)),
            scratch_shapes=[
                pltpu.VMEM((CPADM, LANES + 2 * M), jnp.float32),  # concat canvas
                pltpu.VMEM((9 * CPADM, LANES), jnp.float32),      # im2col patches
            ],
        ),
        compiler_params=pltpu.CompilerParams(
            dimension_semantics=("parallel",)),
    )(x1f, x2f, upmat, maskb, w1f, s1, b1, w2f, s2, b2)

    # undo the lane-batched layout: (S, cout, Nb*HW2) -> (N, cout, H2, W2)
    out = (out.reshape(S, cout, Nb, HW2).transpose(0, 2, 1, 3)
              .reshape(N, cout, H2, W2))
    return out


# ---------------------------------------------------------------------------
# pure-JAX reference (for correctness check)
# ---------------------------------------------------------------------------
def ref_up_forward(x1, x2, w1_4d, s1, b1, w2_4d, s2, b2):
    N, C, H, W = x1.shape
    uh = jnp.asarray(bilinear_matrix(2 * H, H))
    uw = jnp.asarray(bilinear_matrix(2 * W, W))
    x1u = jnp.einsum("ih,nchw,jw->ncij", uh, x1, uw)
    diffY = x2.shape[2] - x1u.shape[2]
    diffX = x2.shape[3] - x1u.shape[3]
    x1p = jnp.pad(x1u, ((0, 0), (0, 0),
                        (diffY // 2, diffY - diffY // 2),
                        (diffX // 2, diffX - diffX // 2)))
    x = jnp.concatenate([x2, x1p], axis=1)

    def cbr(x, w, s, b):
        y = jax.lax.conv_general_dilated(
            x, w, (1, 1), "SAME",
            dimension_numbers=("NCHW", "HWIO", "NCHW"))
        y = y * s[None, :, None, None] + b[None, :, None, None]
        return jnp.maximum(y, 0.0)

    return cbr(cbr(x, w1_4d, s1, b1), w2_4d, s2, b2)


# ---------------------------------------------------------------------------
if __name__ == "__main__":
    key = jax.random.PRNGKey(0)
    keys = jax.random.split(key, 16)

    # Up(in_channels=8, out_channels=4, bilinear=True)
    in_channels, out_channels = 8, 4
    mid_channels = in_channels // 2        # 4
    N, H, W = 2, 8, 8
    c1 = in_channels // 2                  # channels of x1 (deep feature)
    c2 = in_channels - c1                  # channels of x2 (skip connection)

    x1 = jax.random.normal(keys[0], (N, c1, H, W), jnp.float32)
    x2 = jax.random.normal(keys[1], (N, c2, 2 * H, 2 * W), jnp.float32)

    # conv weights stored HWIO; BN params folded to eval-mode scale/bias
    w1_4d = 0.1 * jax.random.normal(keys[2], (3, 3, in_channels, mid_channels), jnp.float32)
    cb1 = 0.1 * jax.random.normal(keys[3], (mid_channels,), jnp.float32)
    g1 = 1.0 + 0.1 * jax.random.normal(keys[4], (mid_channels,), jnp.float32)
    be1 = 0.1 * jax.random.normal(keys[5], (mid_channels,), jnp.float32)
    rm1 = 0.1 * jax.random.normal(keys[6], (mid_channels,), jnp.float32)
    rv1 = jax.random.uniform(keys[7], (mid_channels,), jnp.float32, 0.5, 1.5)

    w2_4d = 0.1 * jax.random.normal(keys[8], (3, 3, mid_channels, out_channels), jnp.float32)
    cb2 = 0.1 * jax.random.normal(keys[9], (out_channels,), jnp.float32)
    g2 = 1.0 + 0.1 * jax.random.normal(keys[10], (out_channels,), jnp.float32)
    be2 = 0.1 * jax.random.normal(keys[11], (out_channels,), jnp.float32)
    rm2 = 0.1 * jax.random.normal(keys[12], (out_channels,), jnp.float32)
    rv2 = jax.random.uniform(keys[13], (out_channels,), jnp.float32, 0.5, 1.5)

    s1, fb1 = fold_bn(cb1, g1, be1, rm1, rv1)
    s2, fb2 = fold_bn(cb2, g2, be2, rm2, rv2)

    params = dict(w1=w1_4d, s1=s1, b1=fb1, w2=w2_4d, s2=s2, b2=fb2)

    out = up_forward(x1, x2, params)
    out = jax.block_until_ready(out)
    assert out.shape == (N, out_channels, 2 * H, 2 * W), out.shape

    ref = ref_up_forward(x1, x2, w1_4d, s1, fb1, w2_4d, s2, fb2)
    np.testing.assert_allclose(np.asarray(out), np.asarray(ref),
                               atol=2e-3, rtol=2e-3)
    print("KERNEL_OK")
</pallas_src>

<mosaic_0001>
module attributes {stable_mosaic.version = 11 : i64} {
  func.func @kernel(%arg0: i32, %arg1: memref<8x64xf32, #tpu.memory_space<vmem>>, %arg2: memref<1x4x512xf32, #tpu.memory_space<vmem>>, %arg3: memref<64x256xf32, #tpu.memory_space<vmem>>, %arg4: memref<72x512xf32, #tpu.memory_space<vmem>>, %arg5: memref<4x72xf32, #tpu.memory_space<vmem>>, %arg6: memref<4x1xf32, #tpu.memory_space<vmem>>, %arg7: memref<4x1xf32, #tpu.memory_space<vmem>>, %arg8: memref<4x72xf32, #tpu.memory_space<vmem>>, %arg9: memref<4x1xf32, #tpu.memory_space<vmem>>, %arg10: memref<4x1xf32, #tpu.memory_space<vmem>>, %arg11: memref<1x4x512xf32, #tpu.memory_space<vmem>>, %arg12: memref<8x768xf32, #tpu.memory_space<vmem>>, %arg13: memref<72x512xf32, #tpu.memory_space<vmem>>) attributes {dimension_semantics = [#tpu.dimension_semantics<parallel>], iteration_bounds = array<i64: 1>, scalar_prefetch = 0 : i64, scratch_operands = 2 : i64, tpu.core_type = #tpu.core_type<tc>, window_params = [{transform_indices = @transform_0, window_bounds = array<i64: 8, 64>}, {transform_indices = @transform_1, window_bounds = array<i64: 1, 4, 512>}, {pipeline_mode = #tpu.pipeline_mode<synchronous>, transform_indices = @transform_2, window_bounds = array<i64: 64, 256>}, {pipeline_mode = #tpu.pipeline_mode<synchronous>, transform_indices = @transform_3, window_bounds = array<i64: 72, 512>}, {pipeline_mode = #tpu.pipeline_mode<synchronous>, transform_indices = @transform_4, window_bounds = array<i64: 4, 72>}, {pipeline_mode = #tpu.pipeline_mode<synchronous>, transform_indices = @transform_5, window_bounds = array<i64: 4, 1>}, {pipeline_mode = #tpu.pipeline_mode<synchronous>, transform_indices = @transform_6, window_bounds = array<i64: 4, 1>}, {pipeline_mode = #tpu.pipeline_mode<synchronous>, transform_indices = @transform_7, window_bounds = array<i64: 4, 72>}, {pipeline_mode = #tpu.pipeline_mode<synchronous>, transform_indices = @transform_8, window_bounds = array<i64: 4, 1>}, {pipeline_mode = #tpu.pipeline_mode<synchronous>, transform_indices = @transform_9, window_bounds = array<i64: 4, 1>}, {transform_indices = @transform_10, window_bounds = array<i64: 1, 4, 512>}]} {
    %cst = arith.constant 0.000000e+00 : f32
    %0 = vector.broadcast %cst : f32 to vector<8x128xf32>
    %c0 = arith.constant 0 : index
    %c0_0 = arith.constant 0 : index
    %1 = vector.load %arg12[%c0, %c0_0] : memref<8x768xf32, #tpu.memory_space<vmem>>, vector<8x128xf32>
    tpu.vector_store %arg12[%c0, %c0_0], %0 {strides = array<i32>} : memref<8x768xf32, #tpu.memory_space<vmem>>, vector<8x128xf32>,
    %cst_1 = arith.constant 0.000000e+00 : f32
    %2 = vector.broadcast %cst_1 : f32 to vector<8x128xf32>
    %c0_2 = arith.constant 0 : index
    %c640 = arith.constant 640 : index
    %3 = vector.load %arg12[%c0_2, %c640] : memref<8x768xf32, #tpu.memory_space<vmem>>, vector<8x128xf32>
    tpu.vector_store %arg12[%c0_2, %c640], %2 {strides = array<i32>} : memref<8x768xf32, #tpu.memory_space<vmem>>, vector<8x128xf32>,
    %c0_3 = arith.constant 0 : index
    %c0_4 = arith.constant 0 : index
    %4 = vector.load %arg1[%c0_3, %c0_4] : memref<8x64xf32, #tpu.memory_space<vmem>>, vector<8x64xf32>
    %c0_5 = arith.constant 0 : index
    %c0_6 = arith.constant 0 : index
    %5 = vector.load %arg3[%c0_5, %c0_6] : memref<64x256xf32, #tpu.memory_space<vmem>>, vector<64x256xf32>
    %cst_7 = arith.constant dense<0.000000e+00> : vector<8x256xf32>
    %6 = tpu.matmul %4, %5, %cst_7 {dimension_numbers = #tpu.dot_dimension_numbers<[1], [0], [0], [1], [0, 0, 1, 1], [], []>} : vector<8x64xf32>, vector<64x256xf32>, vector<8x256xf32> -> vector<8x256xf32>
    %c0_8 = arith.constant 0 : index
    %c0_9 = arith.constant 0 : index
    %c0_10 = arith.constant 0 : index
    %7 = vector.load %arg2[%c0_8, %c0_9, %c0_10] : memref<1x4x512xf32, #tpu.memory_space<vmem>>, vector<1x4x512xf32>
    %8 = vector.shape_cast %7 : vector<1x4x512xf32> to vector<4x512xf32>
    %c0_11 = arith.constant 0 : index
    %c128 = arith.constant 128 : index
    %9 = vector.load %arg12[%c0_11, %c128] : memref<8x768xf32, #tpu.memory_space<vmem>>, vector<4x512xf32>
    tpu.vector_store %arg12[%c0_11, %c128], %8 {strides = array<i32>} : memref<8x768xf32, #tpu.memory_space<vmem>>, vector<4x512xf32>,
    %10 = vector.extract_strided_slice %6 {offsets = [0, 0], sizes = [4, 256], strides = [1, 1]} : vector<8x256xf32> to vector<4x256xf32>
    %c4 = arith.constant 4 : index
    %c128_12 = arith.constant 128 : index
    %11 = vector.load %arg12[%c4, %c128_12] : memref<8x768xf32, #tpu.memory_space<vmem>>, vector<4x256xf32>
    tpu.vector_store %arg12[%c4, %c128_12], %10 {strides = array<i32>} : memref<8x768xf32, #tpu.memory_space<vmem>>, vector<4x256xf32>,
    %12 = vector.extract_strided_slice %6 {offsets = [4, 0], sizes = [4, 256], strides = [1, 1]} : vector<8x256xf32> to vector<4x256xf32>
    %c4_13 = arith.constant 4 : index
    %c384 = arith.constant 384 : index
    %13 = vector.load %arg12[%c4_13, %c384] : memref<8x768xf32, #tpu.memory_space<vmem>>, vector<4x256xf32>
    tpu.vector_store %arg12[%c4_13, %c384], %12 {strides = array<i32>} : memref<8x768xf32, #tpu.memory_space<vmem>>, vector<4x256xf32>,
    %c0_14 = arith.constant 0 : index
    %c111 = arith.constant 111 : index
    %14 = vector.load %arg12[%c0_14, %c111] : memref<8x768xf32, #tpu.memory_space<vmem>>, vector<8x512xf32>
    %c0_15 = arith.constant 0 : index
    %c0_16 = arith.constant 0 : index
    %15 = vector.load %arg4[%c0_15, %c0_16] : memref<72x512xf32, #tpu.memory_space<vmem>>, vector<8x512xf32>
    %16 = arith.mulf %14, %15 : vector<8x512xf32>
    %c0_17 = arith.constant 0 : index
    %c0_18 = arith.constant 0 : index
    %17 = vector.load %arg13[%c0_17, %c0_18] : memref<72x512xf32, #tpu.memory_space<vmem>>, vector<8x512xf32>
    tpu.vector_store %arg13[%c0_17, %c0_18], %16 {strides = array<i32>} : memref<72x512xf32, #tpu.memory_space<vmem>>, vector<8x512xf32>,
    %c0_19 = arith.constant 0 : index
    %c112 = arith.constant 112 : index
    %18 = vector.load %arg12[%c0_19, %c112] : memref<8x768xf32, #tpu.memory_space<vmem>>, vector<8x512xf32>
    %c8 = arith.constant 8 : index
    %c0_20 = arith.constant 0 : index
    %19 = vector.load %arg4[%c8, %c0_20] : memref<72x512xf32, #tpu.memory_space<vmem>>, vector<8x512xf32>
    %20 = arith.mulf %18, %19 : vector<8x512xf32>
    %c8_21 = arith.constant 8 : index
    %c0_22 = arith.constant 0 : index
    %21 = vector.load %arg13[%c8_21, %c0_22] : memref<72x512xf32, #tpu.memory_space<vmem>>, vector<8x512xf32>
    tpu.vector_store %arg13[%c8_21, %c0_22], %20 {strides = array<i32>} : memref<72x512xf32, #tpu.memory_space<vmem>>, vector<8x512xf32>,
    %c0_23 = arith.constant 0 : index
    %c113 = arith.constant 113 : index
    %22 = vector.load %arg12[%c0_23, %c113] : memref<8x768xf32, #tpu.memory_space<vmem>>, vector<8x512xf32>
    %c16 = arith.constant 16 : index
    %c0_24 = arith.constant 0 : index
    %23 = vector.load %arg4[%c16, %c0_24] : memref<72x512xf32, #tpu.memory_space<vmem>>, vector<8x512xf32>
    %24 = arith.mulf %22, %23 : vector<8x512xf32>
    %c16_25 = arith.constant 16 : index
    %c0_26 = arith.constant 0 : index
    %25 = vector.load %arg13[%c16_25, %c0_26] : memref<72x512xf32, #tpu.memory_space<vmem>>, vector<8x512xf32>
    tpu.vector_store %arg13[%c16_25, %c0_26], %24 {strides = array<i32>} : memref<72x512xf32, #tpu.memory_space<vmem>>, vector<8x512xf32>,
    %c0_27 = arith.constant 0 : index
    %c127 = arith.constant 127 : index
    %26 = vector.load %arg12[%c0_27, %c127] : memref<8x768xf32, #tpu.memory_space<vmem>>, vector<8x512xf32>
    %c24 = arith.constant 24 : index
    %c0_28 = arith.constant 0 : index
    %27 = vector.load %arg4[%c24, %c0_28] : memref<72x512xf32, #tpu.memory_space<vmem>>, vector<8x512xf32>
    %28 = arith.mulf %26, %27 : vector<8x512xf32>
    %c24_29 = arith.constant 24 : index
    %c0_30 = arith.constant 0 : index
    %29 = vector.load %arg13[%c24_29, %c0_30] : memref<72x512xf32, #tpu.memory_space<vmem>>, vector<8x512xf32>
    tpu.vector_store %arg13[%c24_29, %c0_30], %28 {strides = array<i32>} : memref<72x512xf32, #tpu.memory_space<vmem>>, vector<8x512xf32>,
    %c0_31 = arith.constant 0 : index
    %c128_32 = arith.constant 128 : index
    %30 = vector.load %arg12[%c0_31, %c128_32] : memref<8x768xf32, #tpu.memory_space<vmem>>, vector<8x512xf32>
    %c32 = arith.constant 32 : index
    %c0_33 = arith.constant 0 : index
    %31 = vector.load %arg13[%c32, %c0_33] : memref<72x512xf32, #tpu.memory_space<vmem>>, vector<8x512xf32>
    tpu.vector_store %arg13[%c32, %c0_33], %30 {strides = array<i32>} : memref<72x512xf32, #tpu.memory_space<vmem>>, vector<8x512xf32>,
    %c0_34 = arith.constant 0 : index
    %c129 = arith.constant 129 : index
    %32 = vector.load %arg12[%c0_34, %c129] : memref<8x768xf32, #tpu.memory_space<vmem>>, vector<8x512xf32>
    %c40 = arith.constant 40 : index
    %c0_35 = arith.constant 0 : index
    %33 = vector.load %arg4[%c40, %c0_35] : memref<72x512xf32, #tpu.memory_space<vmem>>, vector<8x512xf32>
    %34 = arith.mulf %32, %33 : vector<8x512xf32>
    %c40_36 = arith.constant 40 : index
    %c0_37 = arith.constant 0 : index
    %35 = vector.load %arg13[%c40_36, %c0_37] : memref<72x512xf32, #tpu.memory_space<vmem>>, vector<8x512xf32>
    tpu.vector_store %arg13[%c40_36, %c0_37], %34 {strides = array<i32>} : memref<72x512xf32, #tpu.memory_space<vmem>>, vector<8x512xf32>,
    %c0_38 = arith.constant 0 : index
    %c143 = arith.constant 143 : index
    %36 = vector.load %arg12[%c0_38, %c143] : memref<8x768xf32, #tpu.memory_space<vmem>>, vector<8x512xf32>
    %c48 = arith.constant 48 : index
    %c0_39 = arith.constant 0 : index
    %37 = vector.load %arg4[%c48, %c0_39] : memref<72x512xf32, #tpu.memory_space<vmem>>, vector<8x512xf32>
    %38 = arith.mulf %36, %37 : vector<8x512xf32>
    %c48_40 = arith.constant 48 : index
    %c0_41 = arith.constant 0 : index
    %39 = vector.load %arg13[%c48_40, %c0_41] : memref<72x512xf32, #tpu.memory_space<vmem>>, vector<8x512xf32>
    tpu.vector_store %arg13[%c48_40, %c0_41], %38 {strides = array<i32>} : memref<72x512xf32, #tpu.memory_space<vmem>>, vector<8x512xf32>,
    %c0_42 = arith.constant 0 : index
    %c144 = arith.constant 144 : index
    %40 = vector.load %arg12[%c0_42, %c144] : memref<8x768xf32, #tpu.memory_space<vmem>>, vector<8x512xf32>
    %c56 = arith.constant 56 : index
    %c0_43 = arith.constant 0 : index
    %41 = vector.load %arg4[%c56, %c0_43] : memref<72x512xf32, #tpu.memory_space<vmem>>, vector<8x512xf32>
    %42 = arith.mulf %40, %41 : vector<8x512xf32>
    %c56_44 = arith.constant 56 : index
    %c0_45 = arith.constant 0 : index
    %43 = vector.load %arg13[%c56_44, %c0_45] : memref<72x512xf32, #tpu.memory_space<vmem>>, vector<8x512xf32>
    tpu.vector_store %arg13[%c56_44, %c0_45], %42 {strides = array<i32>} : memref<72x512xf32, #tpu.memory_space<vmem>>, vector<8x512xf32>,
    %c0_46 = arith.constant 0 : index
    %c145 = arith.constant 145 : index
    %44 = vector.load %arg12[%c0_46, %c145] : memref<8x768xf32, #tpu.memory_space<vmem>>, vector<8x512xf32>
    %c64 = arith.constant 64 : index
    %c0_47 = arith.constant 0 : index
    %45 = vector.load %arg4[%c64, %c0_47] : memref<72x512xf32, #tpu.memory_space<vmem>>, vector<8x512xf32>
    %46 = arith.mulf %44, %45 : vector<8x512xf32>
    %c64_48 = arith.constant 64 : index
    %c0_49 = arith.constant 0 : index
    %47 = vector.load %arg13[%c64_48, %c0_49] : memref<72x512xf32, #tpu.memory_space<vmem>>, vector<8x512xf32>
    tpu.vector_store %arg13[%c64_48, %c0_49], %46 {strides = array<i32>} : memref<72x512xf32, #tpu.memory_space<vmem>>, vector<8x512xf32>,
    %c0_50 = arith.constant 0 : index
    %c0_51 = arith.constant 0 : index
    %48 = vector.load %arg5[%c0_50, %c0_51] : memref<4x72xf32, #tpu.memory_space<vmem>>, vector<4x72xf32>
    %c0_52 = arith.constant 0 : index
    %c0_53 = arith.constant 0 : index
    %49 = vector.load %arg13[%c0_52, %c0_53] : memref<72x512xf32, #tpu.memory_space<vmem>>, vector<72x512xf32>
    %cst_54 = arith.constant dense<0.000000e+00> : vector<4x512xf32>
    %50 = tpu.matmul %48, %49, %cst_54 {dimension_numbers = #tpu.dot_dimension_numbers<[1], [0], [0], [1], [0, 0, 1, 1], [], []>} : vector<4x72xf32>, vector<72x512xf32>, vector<4x512xf32> -> vector<4x512xf32>
    %c0_55 = arith.constant 0 : index
    %c0_56 = arith.constant 0 : index
    %51 = vector.load %arg6[%c0_55, %c0_56] : memref<4x1xf32, #tpu.memory_space<vmem>>, vector<4x1xf32>
    %52 = vector.broadcast %51 : vector<4x1xf32> to vector<4x512xf32>
    %53 = arith.mulf %50, %52 : vector<4x512xf32>
    %c0_57 = arith.constant 0 : index
    %c0_58 = arith.constant 0 : index
    %54 = vector.load %arg7[%c0_57, %c0_58] : memref<4x1xf32, #tpu.memory_space<vmem>>, vector<4x1xf32>
    %55 = vector.broadcast %54 : vector<4x1xf32> to vector<4x512xf32>
    %56 = arith.addf %53, %55 : vector<4x512xf32>
    %cst_59 = arith.constant 0.000000e+00 : f32
    %57 = vector.broadcast %cst_59 : f32 to vector<4x512xf32>
    %58 = arith.maximumf %56, %57 : vector<4x512xf32>
    %c0_60 = arith.constant 0 : index
    %c128_61 = arith.constant 128 : index
    %59 = vector.load %arg12[%c0_60, %c128_61] : memref<8x768xf32, #tpu.memory_space<vmem>>, vector<4x512xf32>
    tpu.vector_store %arg12[%c0_60, %c128_61], %58 {strides = array<i32>} : memref<8x768xf32, #tpu.memory_space<vmem>>, vector<4x512xf32>,
    %cst_62 = arith.constant 0.000000e+00 : f32
    %60 = vector.broadcast %cst_62 : f32 to vector<4x512xf32>
    %c4_63 = arith.constant 4 : index
    %c128_64 = arith.constant 128 : index
    %61 = vector.load %arg12[%c4_63, %c128_64] : memref<8x768xf32, #tpu.memory_space<vmem>>, vector<4x512xf32>
    tpu.vector_store %arg12[%c4_63, %c128_64], %60 {strides = array<i32>} : memref<8x768xf32, #tpu.memory_space<vmem>>, vector<4x512xf32>,
    %c0_65 = arith.constant 0 : index
    %c111_66 = arith.constant 111 : index
    %62 = vector.load %arg12[%c0_65, %c111_66] : memref<8x768xf32, #tpu.memory_space<vmem>>, vector<8x512xf32>
    %c0_67 = arith.constant 0 : index
    %c0_68 = arith.constant 0 : index
    %63 = vector.load %arg4[%c0_67, %c0_68] : memref<72x512xf32, #tpu.memory_space<vmem>>, vector<8x512xf32>
    %64 = arith.mulf %62, %63 : vector<8x512xf32>
    %c0_69 = arith.constant 0 : index
    %c0_70 = arith.constant 0 : index
    %65 = vector.load %arg13[%c0_69, %c0_70] : memref<72x512xf32, #tpu.memory_space<vmem>>, vector<8x512xf32>
    tpu.vector_store %arg13[%c0_69, %c0_70], %64 {strides = array<i32>} : memref<72x512xf32, #tpu.memory_space<vmem>>, vector<8x512xf32>,
    %c0_71 = arith.constant 0 : index
    %c112_72 = arith.constant 112 : index
    %66 = vector.load %arg12[%c0_71, %c112_72] : memref<8x768xf32, #tpu.memory_space<vmem>>, vector<8x512xf32>
    %c8_73 = arith.constant 8 : index
    %c0_74 = arith.constant 0 : index
    %67 = vector.load %arg4[%c8_73, %c0_74] : memref<72x512xf32, #tpu.memory_space<vmem>>, vector<8x512xf32>
    %68 = arith.mulf %66, %67 : vector<8x512xf32>
    %c8_75 = arith.constant 8 : index
    %c0_76 = arith.constant 0 : index
    %69 = vector.load %arg13[%c8_75, %c0_76] : memref<72x512xf32, #tpu.memory_space<vmem>>, vector<8x512xf32>
    tpu.vector_store %arg13[%c8_75, %c0_76], %68 {strides = array<i32>} : memref<72x512xf32, #tpu.memory_space<vmem>>, vector<8x512xf32>,
    %c0_77 = arith.constant 0 : index
    %c113_78 = arith.constant 113 : index
    %70 = vector.load %arg12[%c0_77, %c113_78] : memref<8x768xf32, #tpu.memory_space<vmem>>, vector<8x512xf32>
    %c16_79 = arith.constant 16 : index
    %c0_80 = arith.constant 0 : index
    %71 = vector.load %arg4[%c16_79, %c0_80] : memref<72x512xf32, #tpu.memory_space<vmem>>, vector<8x512xf32>
    %72 = arith.mulf %70, %71 : vector<8x512xf32>
    %c16_81 = arith.constant 16 : index
    %c0_82 = arith.constant 0 : index
    %73 = vector.load %arg13[%c16_81, %c0_82] : memref<72x512xf32, #tpu.memory_space<vmem>>, vector<8x512xf32>
    tpu.vector_store %arg13[%c16_81, %c0_82], %72 {strides = array<i32>} : memref<72x512xf32, #tpu.memory_space<vmem>>, vector<8x512xf32>,
    %c0_83 = arith.constant 0 : index
    %c127_84 = arith.constant 127 : index
    %74 = vector.load %arg12[%c0_83, %c127_84] : memref<8x768xf32, #tpu.memory_space<vmem>>, vector<8x512xf32>
    %c24_85 = arith.constant 24 : index
    %c0_86 = arith.constant 0 : index
    %75 = vector.load %arg4[%c24_85, %c0_86] : memref<72x512xf32, #tpu.memory_space<vmem>>, vector<8x512xf32>
    %76 = arith.mulf %74, %75 : vector<8x512xf32>
    %c24_87 = arith.constant 24 : index
    %c0_88 = arith.constant 0 : index
    %77 = vector.load %arg13[%c24_87, %c0_88] : memref<72x512xf32, #tpu.memory_space<vmem>>, vector<8x512xf32>
    tpu.vector_store %arg13[%c24_87, %c0_88], %76 {strides = array<i32>} : memref<72x512xf32, #tpu.memory_space<vmem>>, vector<8x512xf32>,
    %c0_89 = arith.constant 0 : index
    %c128_90 = arith.constant 128 : index
    %78 = vector.load %arg12[%c0_89, %c128_90] : memref<8x768xf32, #tpu.memory_space<vmem>>, vector<8x512xf32>
    %c32_91 = arith.constant 32 : index
    %c0_92 = arith.constant 0 : index
    %79 = vector.load %arg13[%c32_91, %c0_92] : memref<72x512xf32, #tpu.memory_space<vmem>>, vector<8x512xf32>
    tpu.vector_store %arg13[%c32_91, %c0_92], %78 {strides = array<i32>} : memref<72x512xf32, #tpu.memory_space<vmem>>, vector<8x512xf32>,
    %c0_93 = arith.constant 0 : index
    %c129_94 = arith.constant 129 : index
    %80 = vector.load %arg12[%c0_93, %c129_94] : memref<8x768xf32, #tpu.memory_space<vmem>>, vector<8x512xf32>
    %c40_95 = arith.constant 40 : index
    %c0_96 = arith.constant 0 : index
    %81 = vector.load %arg4[%c40_95, %c0_96] : memref<72x512xf32, #tpu.memory_space<vmem>>, vector<8x512xf32>
    %82 = arith.mulf %80, %81 : vector<8x512xf32>
    %c40_97 = arith.constant 40 : index
    %c0_98 = arith.constant 0 : index
    %83 = vector.load %arg13[%c40_97, %c0_98] : memref<72x512xf32, #tpu.memory_space<vmem>>, vector<8x512xf32>
    tpu.vector_store %arg13[%c40_97, %c0_98], %82 {strides = array<i32>} : memref<72x512xf32, #tpu.memory_space<vmem>>, vector<8x512xf32>,
    %c0_99 = arith.constant 0 : index
    %c143_100 = arith.constant 143 : index
    %84 = vector.load %arg12[%c0_99, %c143_100] : memref<8x768xf32, #tpu.memory_space<vmem>>, vector<8x512xf32>
    %c48_101 = arith.constant 48 : index
    %c0_102 = arith.constant 0 : index
    %85 = vector.load %arg4[%c48_101, %c0_102] : memref<72x512xf32, #tpu.memory_space<vmem>>, vector<8x512xf32>
    %86 = arith.mulf %84, %85 : vector<8x512xf32>
    %c48_103 = arith.constant 48 : index
    %c0_104 = arith.constant 0 : index
    %87 = vector.load %arg13[%c48_103, %c0_104] : memref<72x512xf32, #tpu.memory_space<vmem>>, vector<8x512xf32>
    tpu.vector_store %arg13[%c48_103, %c0_104], %86 {strides = array<i32>} : memref<72x512xf32, #tpu.memory_space<vmem>>, vector<8x512xf32>,
    %c0_105 = arith.constant 0 : index
    %c144_106 = arith.constant 144 : index
    %88 = vector.load %arg12[%c0_105, %c144_106] : memref<8x768xf32, #tpu.memory_space<vmem>>, vector<8x512xf32>
    %c56_107 = arith.constant 56 : index
    %c0_108 = arith.constant 0 : index
    %89 = vector.load %arg4[%c56_107, %c0_108] : memref<72x512xf32, #tpu.memory_space<vmem>>, vector<8x512xf32>
    %90 = arith.mulf %88, %89 : vector<8x512xf32>
    %c56_109 = arith.constant 56 : index
    %c0_110 = arith.constant 0 : index
    %91 = vector.load %arg13[%c56_109, %c0_110] : memref<72x512xf32, #tpu.memory_space<vmem>>, vector<8x512xf32>
    tpu.vector_store %arg13[%c56_109, %c0_110], %90 {strides = array<i32>} : memref<72x512xf32, #tpu.memory_space<vmem>>, vector<8x512xf32>,
    %c0_111 = arith.constant 0 : index
    %c145_112 = arith.constant 145 : index
    %92 = vector.load %arg12[%c0_111, %c145_112] : memref<8x768xf32, #tpu.memory_space<vmem>>, vector<8x512xf32>
    %c64_113 = arith.constant 64 : index
    %c0_114 = arith.constant 0 : index
    %93 = vector.load %arg4[%c64_113, %c0_114] : memref<72x512xf32, #tpu.memory_space<vmem>>, vector<8x512xf32>
    %94 = arith.mulf %92, %93 : vector<8x512xf32>
    %c64_115 = arith.constant 64 : index
    %c0_116 = arith.constant 0 : index
    %95 = vector.load %arg13[%c64_115, %c0_116] : memref<72x512xf32, #tpu.memory_space<vmem>>, vector<8x512xf32>
    tpu.vector_store %arg13[%c64_115, %c0_116], %94 {strides = array<i32>} : memref<72x512xf32, #tpu.memory_space<vmem>>, vector<8x512xf32>,
    %c0_117 = arith.constant 0 : index
    %c0_118 = arith.constant 0 : index
    %96 = vector.load %arg8[%c0_117, %c0_118] : memref<4x72xf32, #tpu.memory_space<vmem>>, vector<4x72xf32>
    %c0_119 = arith.constant 0 : index
    %c0_120 = arith.constant 0 : index
    %97 = vector.load %arg13[%c0_119, %c0_120] : memref<72x512xf32, #tpu.memory_space<vmem>>, vector<72x512xf32>
    %cst_121 = arith.constant dense<0.000000e+00> : vector<4x512xf32>
    %98 = tpu.matmul %96, %97, %cst_121 {dimension_numbers = #tpu.dot_dimension_numbers<[1], [0], [0], [1], [0, 0, 1, 1], [], []>} : vector<4x72xf32>, vector<72x512xf32>, vector<4x512xf32> -> vector<4x512xf32>
    %c0_122 = arith.constant 0 : index
    %c0_123 = arith.constant 0 : index
    %99 = vector.load %arg9[%c0_122, %c0_123] : memref<4x1xf32, #tpu.memory_space<vmem>>, vector<4x1xf32>
    %100 = vector.broadcast %99 : vector<4x1xf32> to vector<4x512xf32>
    %101 = arith.mulf %98, %100 : vector<4x512xf32>
    %c0_124 = arith.constant 0 : index
    %c0_125 = arith.constant 0 : index
    %102 = vector.load %arg10[%c0_124, %c0_125] : memref<4x1xf32, #tpu.memory_space<vmem>>, vector<4x1xf32>
    %103 = vector.broadcast %102 : vector<4x1xf32> to vector<4x512xf32>
    %104 = arith.addf %101, %103 : vector<4x512xf32>
    %cst_126 = arith.constant 0.000000e+00 : f32
    %105 = vector.broadcast %cst_126 : f32 to vector<4x512xf32>
    %106 = arith.maximumf %104, %105 : vector<4x512xf32>
    %c0_127 = arith.constant 0 : index
    %c0_128 = arith.constant 0 : index
    %c0_129 = arith.constant 0 : index
    %107 = vector.load %arg11[%c0_127, %c0_128, %c0_129] : memref<1x4x512xf32, #tpu.memory_space<vmem>>, vector<1x4x512xf32>
    %108 = vector.shape_cast %107 : vector<1x4x512xf32> to vector<4x512xf32>
    %109 = vector.shape_cast %106 : vector<4x512xf32> to vector<1x4x512xf32>
    tpu.vector_store %arg11[%c0_127, %c0_128, %c0_129], %109 {strides = array<i32>} : memref<1x4x512xf32, #tpu.memory_space<vmem>>, vector<1x4x512xf32>,
    return
  }
  func.func @transform_0(%arg0: i32) -> (i32, i32) {
    %c0_i32 = arith.constant 0 : i32
    %c0_i32_0 = arith.constant 0 : i32
    return %arg0, %c0_i32 : i32, i32
  }
  func.func @transform_1(%arg0: i32) -> (i32, i32, i32) {
    %c0_i32 = arith.constant 0 : i32
    %c0_i32_0 = arith.constant 0 : i32
    %c0_i32_1 = arith.constant 0 : i32
    return %arg0, %c0_i32, %c0_i32_0 : i32, i32, i32
  }
  func.func @transform_2(%arg0: i32) -> (i32, i32) {
    %c0_i32 = arith.constant 0 : i32
    %c0_i32_0 = arith.constant 0 : i32
    %c0_i32_1 = arith.constant 0 : i32
    return %c0_i32, %c0_i32_0 : i32, i32
  }
  func.func @transform_3(%arg0: i32) -> (i32, i32) {
    %c0_i32 = arith.constant 0 : i32
    %c0_i32_0 = arith.constant 0 : i32
    %c0_i32_1 = arith.constant 0 : i32
    return %c0_i32, %c0_i32_0 : i32, i32
  }
  func.func @transform_4(%arg0: i32) -> (i32, i32) {
    %c0_i32 = arith.constant 0 : i32
    %c0_i32_0 = arith.constant 0 : i32
    %c0_i32_1 = arith.constant 0 : i32
    return %c0_i32, %c0_i32_0 : i32, i32
  }
  func.func @transform_5(%arg0: i32) -> (i32, i32) {
    %c0_i32 = arith.constant 0 : i32
    %c0_i32_0 = arith.constant 0 : i32
    %c0_i32_1 = arith.constant 0 : i32
    return %c0_i32, %c0_i32_0 : i32, i32
  }
  func.func @transform_6(%arg0: i32) -> (i32, i32) {
    %c0_i32 = arith.constant 0 : i32
    %c0_i32_0 = arith.constant 0 : i32
    %c0_i32_1 = arith.constant 0 : i32
    return %c0_i32, %c0_i32_0 : i32, i32
  }
  func.func @transform_7(%arg0: i32) -> (i32, i32) {
    %c0_i32 = arith.constant 0 : i32
    %c0_i32_0 = arith.constant 0 : i32
    %c0_i32_1 = arith.constant 0 : i32
    return %c0_i32, %c0_i32_0 : i32, i32
  }
  func.func @transform_8(%arg0: i32) -> (i32, i32) {
    %c0_i32 = arith.constant 0 : i32
    %c0_i32_0 = arith.constant 0 : i32
    %c0_i32_1 = arith.constant 0 : i32
    return %c0_i32, %c0_i32_0 : i32, i32
  }
  func.func @transform_9(%arg0: i32) -> (i32, i32) {
    %c0_i32 = arith.constant 0 : i32
    %c0_i32_0 = arith.constant 0 : i32
    %c0_i32_1 = arith.constant 0 : i32
    return %c0_i32, %c0_i32_0 : i32, i32
  }
  func.func @transform_10(%arg0: i32) -> (i32, i32, i32) {
    %c0_i32 = arith.constant 0 : i32
    %c0_i32_0 = arith.constant 0 : i32
    %c0_i32_1 = arith.constant 0 : i32
    return %arg0, %c0_i32, %c0_i32_0 : i32, i32, i32
  }
}

</mosaic_0001>

<llo_original>
// kernel: tpu_custom_call.1
$region0: #{tpu_custom_call.1}
  #allocation0 [shape = 'u32[]', space=smem, size = 0x4, offset = 0x4, fixed_abs, tag = 'smem constant byte address 0x4 - core index']
  #allocation1 [shape = 'u32[72,128]{1,0:T(1,128)}', space=vmem, size = 0x9000, scoped, tag = 'internal scratch']
  #allocation2 [shape = 'f32[8,768]{1,0:T(8,128)}', space=vmem, size = 0x6000, scoped, tag = 'scratch operand']
  #allocation3 [shape = 'f32[72,512]{1,0:T(8,128)}', space=vmem, size = 0x24000, scoped, tag = 'scratch operand']
  %s0 = inlined_call_operand.vmem [shape: f32[8,64], index: 0, kind: input, shape index: {}]
  %s1 = inlined_call_operand.hbm [shape: f32[1,4,512], index: 1, kind: input, shape index: {}]
  %s2 = inlined_call_operand.hbm [shape: f32[64,256], index: 2, kind: input, shape index: {}]
  %s3 = inlined_call_operand.hbm [shape: f32[72,512], index: 3, kind: input, shape index: {}]
  %s4 = inlined_call_operand.vmem [shape: f32[4,72], index: 4, kind: input, shape index: {}]
  %s5 = inlined_call_operand.vmem [shape: f32[4,1], index: 5, kind: input, shape index: {}]
  %s6 = inlined_call_operand.vmem [shape: f32[4,1], index: 6, kind: input, shape index: {}]
  %s7 = inlined_call_operand.vmem [shape: f32[4,72], index: 7, kind: input, shape index: {}]
  %s8 = inlined_call_operand.vmem [shape: f32[4,1], index: 8, kind: input, shape index: {}]
  %s9 = inlined_call_operand.vmem [shape: f32[4,1], index: 9, kind: input, shape index: {}]
  %s10 = inlined_call_operand.hbm [shape: f32[1,4,512], index: 10, kind: output, shape index: {}]
  %s11 = sld [smem:[#allocation0]]
  $region62: #{tpu_custom_call.1} parent=0
    _
  %s13 = ssub.s32 1, %s11
  %s14 = scalar_select 0, %s13, %s11
  $region1: #{tpu_custom_call.1} parent=0
    #allocation4 [shape = 'u8[8192]{0}', space=vmem, size = 0x2000, scoped, tag = 'input window, operand 1, single buffered']
    #allocation5 [shape = 's32[1]{0}', space=sflag, size = 0x4, scoped, tag = 'scoped memory for tpu_custom_call.1']
    #allocation6 [shape = 's32[1]{0}', space=sflag, size = 0x4, scoped, tag = 'scoped memory for tpu_custom_call.1']
    #allocation7 [shape = 'u8[65536]{0}', space=vmem, size = 0x10000, scoped, tag = 'input window, operand 2, single buffered']
    #allocation8 [shape = 's32[1]{0}', space=sflag, size = 0x4, scoped, tag = 'scoped memory for tpu_custom_call.1']
    #allocation9 [shape = 'u8[147456]{0}', space=vmem, size = 0x24000, scoped, tag = 'input window, operand 3, single buffered']
    #allocation10 [shape = 'u8[8192]{0}', space=vmem, size = 0x2000, scoped, tag = 'output window, operand 0, single buffered']
    %15 = vsyncpa [#allocation5], 0
    %16 = vsyncpa [#allocation8], 0
    %17 = vsyncpa [#allocation6], 0
    // Predicated region
    $region2: #{tpu_custom_call.1} parent=1 // pred_check
      _
    $region3: #{tpu_custom_call.1} parent=1 // pred_check_branch
      %19 = sbr.rel (0) target = $region5
    $region4: #{tpu_custom_call.1} parent=1 // pred_region
      _
    $region5: #{tpu_custom_call.1} parent=1 // pred_fallthru
      _
    // Predicated region
    $region6: #{tpu_custom_call.1} parent=1 // pred_check
      _
    $region7: #{tpu_custom_call.1} parent=1 // pred_check_branch
      %21 = sbr.rel (0) target = $region9
    $region8: #{tpu_custom_call.1} parent=1 // pred_region
      %23 = vsyncadd [#allocation5], 0
      %s25 = sshll.u32 %s1, 4
      %s26 = int_to_ptr.hbm [resolvable:$true] %s25
      %s27 = sshll.u32 [#allocation4], 4
      %s28 = int_to_ptr.vmem [resolvable:$true] %s27
      %30 = dma.hbm_to_vmem [thread:$0]  %s26, 256, %s28, [#allocation5]
    $region9: #{tpu_custom_call.1} parent=1 // pred_fallthru
      _
    // Predicated region
    $region10: #{tpu_custom_call.1} parent=1 // pred_check
      _
    $region11: #{tpu_custom_call.1} parent=1 // pred_check_branch
      %32 = sbr.rel (0) target = $region13
    $region12: #{tpu_custom_call.1} parent=1 // pred_region
      %34 = vsyncadd [#allocation8], 0
      %s35 = sshll.u32 %s2, 4
      %s36 = int_to_ptr.hbm [resolvable:$true] %s35
      %s37 = sshll.u32 [#allocation7], 4
      %s38 = int_to_ptr.vmem [resolvable:$true] %s37
      %43 = dma.hbm_to_vmem [thread:$0]  %s36, 2048, %s38, [#allocation8], 256, 256, 16
    $region13: #{tpu_custom_call.1} parent=1 // pred_fallthru
      _
    // Predicated region
    $region14: #{tpu_custom_call.1} parent=1 // pred_check
      _
    $region15: #{tpu_custom_call.1} parent=1 // pred_check_branch
      %45 = sbr.rel (0) target = $region17
    $region16: #{tpu_custom_call.1} parent=1 // pred_region
      %47 = vsyncadd [#allocation8], 0
      %s48 = sshll.u32 %s3, 4
      %s49 = int_to_ptr.hbm [resolvable:$true] %s48
      %s50 = sshll.u32 [#allocation9], 4
      %s51 = int_to_ptr.vmem [resolvable:$true] %s50
      %56 = dma.hbm_to_vmem [thread:$0]  %s49, 4608, %s51, [#allocation8], 512, 512, 32
    $region17: #{tpu_custom_call.1} parent=1 // pred_fallthru
      _
    // Predicated region
    $region18: #{tpu_custom_call.1} parent=1 // pred_check
      _
    $region19: #{tpu_custom_call.1} parent=1 // pred_check_branch
      %58 = sbr.rel (0) target = $region21
    $region20: #{tpu_custom_call.1} parent=1 // pred_region
      _
    $region21: #{tpu_custom_call.1} parent=1 // pred_fallthru
      _
    // Predicated region
    $region22: #{tpu_custom_call.1} parent=1 // pred_check
      _
    $region23: #{tpu_custom_call.1} parent=1 // pred_check_branch
      %60 = sbr.rel (0) target = $region25
    $region24: #{tpu_custom_call.1} parent=1 // pred_region
      _
    $region25: #{tpu_custom_call.1} parent=1 // pred_fallthru
      _
    // Predicated region
    $region26: #{tpu_custom_call.1} parent=1 // pred_check
      _
    $region27: #{tpu_custom_call.1} parent=1 // pred_check_branch
      %62 = sbr.rel (0) target = $region29
    $region28: #{tpu_custom_call.1} parent=1 // pred_region
      _
    $region29: #{tpu_custom_call.1} parent=1 // pred_fallthru
      _
    // Predicated region
    $region30: #{tpu_custom_call.1} parent=1 // pred_check
      _
    $region31: #{tpu_custom_call.1} parent=1 // pred_check_branch
      %64 = sbr.rel (0) target = $region33
    $region32: #{tpu_custom_call.1} parent=1 // pred_region
      _
    $region33: #{tpu_custom_call.1} parent=1 // pred_fallthru
      _
    // Predicated region
    $region34: #{tpu_custom_call.1} parent=1 // pred_check
      _
    $region35: #{tpu_custom_call.1} parent=1 // pred_check_branch
      %66 = sbr.rel (0) target = $region37
    $region36: #{tpu_custom_call.1} parent=1 // pred_region
      _
    $region37: #{tpu_custom_call.1} parent=1 // pred_fallthru
      _
    // Predicated region
    $region38: #{tpu_custom_call.1} parent=1 // pred_check
      _
    $region39: #{tpu_custom_call.1} parent=1 // pred_check_branch
      %68 = sbr.rel (0) target = $region41
    $region40: #{tpu_custom_call.1} parent=1 // pred_region
      _
    $region41: #{tpu_custom_call.1} parent=1 // pred_fallthru
      _
    // Predicated region
    $region42: #{tpu_custom_call.1} parent=1 // pred_check
      _
    $region43: #{tpu_custom_call.1} parent=1 // pred_check_branch
      %70 = sbr.rel (0) target = $region45
    $region44: #{tpu_custom_call.1} parent=1 // pred_region
      %72 = dma.done [#allocation5], 256
    $region45: #{tpu_custom_call.1} parent=1 // pred_fallthru
      _
    // Predicated region
    $region46: #{tpu_custom_call.1} parent=1 // pred_check
      _
    $region47: #{tpu_custom_call.1} parent=1 // pred_check_branch
      %74 = sbr.rel (0) target = $region49
    $region48: #{tpu_custom_call.1} parent=1 // pred_region
      %76 = dma.done [#allocation8], 2048
    $region49: #{tpu_custom_call.1} parent=1 // pred_fallthru
      _
    // Predicated region
    $region50: #{tpu_custom_call.1} parent=1 // pred_check
      _
    $region51: #{tpu_custom_call.1} parent=1 // pred_check_branch
      %78 = sbr.rel (0) target = $region53
    $region52: #{tpu_custom_call.1} parent=1 // pred_region
      %80 = dma.done [#allocation8], 4608
    $region53: #{tpu_custom_call.1} parent=1 // pred_fallthru
      _
    %81 = vst [vmem:[#allocation2] sm:$0xff] 0.0
    %82 = vst [vmem:[#allocation2 + $0x28] sm:$0xff] 0.0
    %v83 = vld [vmem:[%s0] sm:$0xff]
    %v84 = vld [vmem:[#allocation7] sm:$0xff]
    %v85 = vld [vmem:[#allocation7 + $0x8] sm:$0xff]
    %v86 = vld [vmem:[#allocation7 + $0x10] sm:$0xff]
    %v87 = vld [vmem:[#allocation7 + $0x18] sm:$0xff]
    %v88 = vld [vmem:[#allocation7 + $0x20] sm:$0xff]
    %v89 = vld [vmem:[#allocation7 + $0x28] sm:$0xff]
    %v90 = vld [vmem:[#allocation7 + $0x30] sm:$0xff]
    %v91 = vld [vmem:[#allocation7 + $0x38] sm:$0xff]
    %v92 = vld [vmem:[#allocation7 + $0x40] sm:$0xff]
    %v93 = vld [vmem:[#allocation7 + $0x48] sm:$0xff]
    %v94 = vld [vmem:[#allocation7 + $0x50] sm:$0xff]
    %v95 = vld [vmem:[#allocation7 + $0x58] sm:$0xff]
    %v96 = vld [vmem:[#allocation7 + $0x60] sm:$0xff]
    %v97 = vld [vmem:[#allocation7 + $0x68] sm:$0xff]
    %v98 = vld [vmem:[#allocation7 + $0x70] sm:$0xff]
    %v99 = vld [vmem:[#allocation7 + $0x78] sm:$0xff]
    %vm100 = vcmask 523264
    %v102 = vsel %vm100, %v83, 0
    %104 = vmatpush.msra.mxu0 0.0
    %105 = vmatpush.msra.mxu0 0.0
    %106 = vmatpush.msra.mxu0 0.0
    %107 = vmatpush.msra.mxu0 0.0
    %108 = vmatpush.msra.mxu0 0.0
    %109 = vmatpush.msra.mxu0 0.0
    %110 = vmatpush.msra.mxu0 0.0
    %111 = vmatpush.msra.mxu0 0.0
    %112 = vmatpush.msra.mxu0 %v98
    %113 = vmatpush.msra.mxu0 %v96
    %114 = vmatpush.msra.mxu0 %v94
    %115 = vmatpush.msra.mxu0 %v92
    %116 = vmatpush.msra.mxu0 %v90
    %117 = vmatpush.msra.mxu0 %v88
    %118 = vmatpush.msra.mxu0 %v86
    %119 = vmatpush.msra.mxu0 %v84
    %120 = vmatmul.f32.gmra.mxu0 %v102
    %v121 = vpop.f32.mrf.mxu0
    %v122 = vadd.f32 0.0, %v121
    %123 = vdwg.mxu0
    %124 = vmatpush.msra.mxu0 0.0
    %125 = vmatpush.msra.mxu0 0.0
    %126 = vmatpush.msra.mxu0 0.0
    %127 = vmatpush.msra.mxu0 0.0
    %128 = vmatpush.msra.mxu0 0.0
    %129 = vmatpush.msra.mxu0 0.0
    %130 = vmatpush.msra.mxu0 0.0
    %131 = vmatpush.msra.mxu0 0.0
    %132 = vmatpush.msra.mxu0 %v99
    %133 = vmatpush.msra.mxu0 %v97
    %134 = vmatpush.msra.mxu0 %v95
    %135 = vmatpush.msra.mxu0 %v93
    %136 = vmatpush.msra.mxu0 %v91
    %137 = vmatpush.msra.mxu0 %v89
    %138 = vmatpush.msra.mxu0 %v87
    %139 = vmatpush.msra.mxu0 %v85
    %140 = vmatmul.f32.gmra.mxu0 %v102
    %v141 = vpop.f32.mrf.mxu0
    %v142 = vadd.f32 0.0, %v141
    %143 = vdwg.mxu0
    %v144 = vld [vmem:[#allocation4] sm:$0xff]
    %v145 = vld [vmem:[#allocation4 + $0x8] sm:$0xff]
    %148 = vst [vmem:[#allocation1] ss:$2 sm:$0xff] %v144
    %s149 = scalar_lea.vmem [#allocation1], 16
    %150 = vst [vmem:[%s149] ss:$2 sm:$0xff] %v145
    %v151 = vld.sshfl [vmem:[#allocation1] sm:$0xff pattern:$0x75316420]
    %v152 = vld.sshfl [vmem:[#allocation1 + $0x8] sm:$0xff pattern:$0x75316420]
    %v153 = vld.sshfl [vmem:[#allocation1 + $0x10] sm:$0xff pattern:$0x75316420]
    %v154 = vld.sshfl [vmem:[#allocation1 + $0x18] sm:$0xff pattern:$0x75316420]
    %159 = vst [vmem:[#allocation2 + $0x8] sm:$0xf] %v151
    %160 = vst [vmem:[#allocation2 + $0x10] sm:$0xf] %v152
    %161 = vst [vmem:[#allocation2 + $0x18] sm:$0xf] %v153
    %162 = vst [vmem:[#allocation2 + $0x20] sm:$0xf] %v154
    %v165 = vrot.slane %v122, 4
    %v166 = vrot.slane %v142, 4
    %169 = vst [vmem:[#allocation2 + $0x8] sm:$0xf0] %v165
    %170 = vst [vmem:[#allocation2 + $0x10] sm:$0xf0] %v166
    %171 = vst [vmem:[#allocation2 + $0x18] sm:$0xf0] %v122
    %172 = vst [vmem:[#allocation2 + $0x20] sm:$0xf0] %v142
    %v173 = vld [vmem:[#allocation2] sm:$0xff]
    %v174 = vld [vmem:[#allocation2 + $0x8] sm:$0xff]
    %v175 = vld [vmem:[#allocation2 + $0x10] sm:$0xff]
    %v176 = vld [vmem:[#allocation2 + $0x18] sm:$0xff]
    %v177 = vld [vmem:[#allocation2 + $0x20] sm:$0xff]
    %v178 = vld [vmem:[#allocation9] sm:$0xff]
    %v179 = vld [vmem:[#allocation9 + $0x8] sm:$0xff]
    %v180 = vld [vmem:[#allocation9 + $0x10] sm:$0xff]
    %v181 = vld [vmem:[#allocation9 + $0x18] sm:$0xff]
    %186 = vrot.lane.b32.xlu0 %v178, 111
    %v187 = vpop.permute.xlu0 %186
    %188 = vrot.lane.b32.xlu0 %v179, 111
    %v189 = vpop.permute.xlu0 %188
    %190 = vrot.lane.b32.xlu0 %v180, 111
    %v191 = vpop.permute.xlu0 %190
    %192 = vrot.lane.b32.xlu0 %v181, 111
    %v193 = vpop.permute.xlu0 %192
    %vm194 = vcmask 908288
    %v195 = vsel %vm194, %v187, %v189
    %v196 = vsel %vm194, %v189, %v191
    %v197 = vsel %vm194, %v191, %v193
    %v203 = vmul.f32 %v173, %v187
    %v204 = vmul.f32 %v174, %v195
    %v205 = vmul.f32 %v175, %v196
    %v206 = vmul.f32 %v176, %v197
    %v207 = vmul.f32 %v177, %v193
    %213 = vrot.lane.b32.xlu0 %v203, 17
    %v214 = vpop.permute.xlu0 %213
    %215 = vrot.lane.b32.xlu0 %v204, 17
    %v216 = vpop.permute.xlu0 %215
    %217 = vrot.lane.b32.xlu0 %v205, 17
    %v218 = vpop.permute.xlu0 %217
    %219 = vrot.lane.b32.xlu0 %v206, 17
    %v220 = vpop.permute.xlu0 %219
    %221 = vrot.lane.b32.xlu0 %v207, 17
    %v222 = vpop.permute.xlu0 %221
    %vm223 = vcmask 138240
    %v224 = vsel %vm223, %v214, %v216
    %v225 = vsel %vm223, %v216, %v218
    %v226 = vsel %vm223, %v218, %v220
    %v227 = vsel %vm223, %v220, %v222
    %232 = vst [vmem:[#allocation3] sm:$0xff] %v224
    %233 = vst [vmem:[#allocation3 + $0x8] sm:$0xff] %v225
    %234 = vst [vmem:[#allocation3 + $0x10] sm:$0xff] %v226
    %235 = vst [vmem:[#allocation3 + $0x18] sm:$0xff] %v227
    %v236 = vld [vmem:[#allocation2] sm:$0xff]
    %v237 = vld [vmem:[#allocation2 + $0x8] sm:$0xff]
    %v238 = vld [vmem:[#allocation2 + $0x10] sm:$0xff]
    %v239 = vld [vmem:[#allocation2 + $0x18] sm:$0xff]
    %v240 = vld [vmem:[#allocation2 + $0x20] sm:$0xff]
    %v241 = vld [vmem:[#allocation9 + $0x20] sm:$0xff]
    %v242 = vld [vmem:[#allocation9 + $0x28] sm:$0xff]
    %v243 = vld [vmem:[#allocation9 + $0x30] sm:$0xff]
    %v244 = vld [vmem:[#allocation9 + $0x38] sm:$0xff]
    %249 = vrot.lane.b32.xlu0 %v241, 112
    %v250 = vpop.permute.xlu0 %249
    %251 = vrot.lane.b32.xlu0 %v242, 112
    %v252 = vpop.permute.xlu0 %251
    %253 = vrot.lane.b32.xlu0 %v243, 112
    %v254 = vpop.permute.xlu0 %253
    %255 = vrot.lane.b32.xlu0 %v244, 112
    %v256 = vpop.permute.xlu0 %255
    %vm257 = vcmask 916480
    %v258 = vsel %vm257, %v250, %v252
    %v259 = vsel %vm257, %v252, %v254
    %v260 = vsel %vm257, %v254, %v256
    %v266 = vmul.f32 %v236, %v250
    %v267 = vmul.f32 %v237, %v258
    %v268 = vmul.f32 %v238, %v259
    %v269 = vmul.f32 %v239, %v260
    %v270 = vmul.f32 %v240, %v256
    %276 = vrot.lane.b32.xlu0 %v266, 16
    %v277 = vpop.permute.xlu0 %276
    %278 = vrot.lane.b32.xlu0 %v267, 16
    %v279 = vpop.permute.xlu0 %278
    %280 = vrot.lane.b32.xlu0 %v268, 16
    %v281 = vpop.permute.xlu0 %280
    %282 = vrot.lane.b32.xlu0 %v269, 16
    %v283 = vpop.permute.xlu0 %282
    %284 = vrot.lane.b32.xlu0 %v270, 16
    %v285 = vpop.permute.xlu0 %284
    %vm286 = vcmask 130048
    %v287 = vsel %vm286, %v277, %v279
    %v288 = vsel %vm286, %v279, %v281
    %v289 = vsel %vm286, %v281, %v283
    %v290 = vsel %vm286, %v283, %v285
    %295 = vst [vmem:[#allocation3 + $0x20] sm:$0xff] %v287
    %296 = vst [vmem:[#allocation3 + $0x28] sm:$0xff] %v288
    %297 = vst [vmem:[#allocation3 + $0x30] sm:$0xff] %v289
    %298 = vst [vmem:[#allocation3 + $0x38] sm:$0xff] %v290
    %v299 = vld [vmem:[#allocation2] sm:$0xff]
    %v300 = vld [vmem:[#allocation2 + $0x8] sm:$0xff]
    %v301 = vld [vmem:[#allocation2 + $0x10] sm:$0xff]
    %v302 = vld [vmem:[#allocation2 + $0x18] sm:$0xff]
    %v303 = vld [vmem:[#allocation2 + $0x20] sm:$0xff]
    %v304 = vld [vmem:[#allocation9 + $0x40] sm:$0xff]
    %v305 = vld [vmem:[#allocation9 + $0x48] sm:$0xff]
    %v306 = vld [vmem:[#allocation9 + $0x50] sm:$0xff]
    %v307 = vld [vmem:[#allocation9 + $0x58] sm:$0xff]
    %312 = vrot.lane.b32.xlu0 %v304, 113
    %v313 = vpop.permute.xlu0 %312
    %314 = vrot.lane.b32.xlu0 %v305, 113
    %v315 = vpop.permute.xlu0 %314
    %316 = vrot.lane.b32.xlu0 %v306, 113
    %v317 = vpop.permute.xlu0 %316
    %318 = vrot.lane.b32.xlu0 %v307, 113
    %v319 = vpop.permute.xlu0 %318
    %vm320 = vcmask 924672
    %v321 = vsel %vm320, %v313, %v315
    %v322 = vsel %vm320, %v315, %v317
    %v323 = vsel %vm320, %v317, %v319
    %v329 = vmul.f32 %v299, %v313
    %v330 = vmul.f32 %v300, %v321
    %v331 = vmul.f32 %v301, %v322
    %v332 = vmul.f32 %v302, %v323
    %v333 = vmul.f32 %v303, %v319
    %339 = vrot.lane.b32.xlu0 %v329, 15
    %v340 = vpop.permute.xlu0 %339
    %341 = vrot.lane.b32.xlu0 %v330, 15
    %v342 = vpop.permute.xlu0 %341
    %343 = vrot.lane.b32.xlu0 %v331, 15
    %v344 = vpop.permute.xlu0 %343
    %345 = vrot.lane.b32.xlu0 %v332, 15
    %v346 = vpop.permute.xlu0 %345
    %347 = vrot.lane.b32.xlu0 %v333, 15
    %v348 = vpop.permute.xlu0 %347
    %vm349 = vcmask 121856
    %v350 = vsel %vm349, %v340, %v342
    %v351 = vsel %vm349, %v342, %v344
    %v352 = vsel %vm349, %v344, %v346
    %v353 = vsel %vm349, %v346, %v348
    %358 = vst [vmem:[#allocation3 + $0x40] sm:$0xff] %v350
    %359 = vst [vmem:[#allocation3 + $0x48] sm:$0xff] %v351
    %360 = vst [vmem:[#allocation3 + $0x50] sm:$0xff] %v352
    %361 = vst [vmem:[#allocation3 + $0x58] sm:$0xff] %v353
    %v362 = vld [vmem:[#allocation2] sm:$0xff]
    %v363 = vld [vmem:[#allocation2 + $0x8] sm:$0xff]
    %v364 = vld [vmem:[#allocation2 + $0x10] sm:$0xff]
    %v365 = vld [vmem:[#allocation2 + $0x18] sm:$0xff]
    %v366 = vld [vmem:[#allocation2 + $0x20] sm:$0xff]
    %v367 = vld [vmem:[#allocation9 + $0x60] sm:$0xff]
    %v368 = vld [vmem:[#allocation9 + $0x68] sm:$0xff]
    %v369 = vld [vmem:[#allocation9 + $0x70] sm:$0xff]
    %v370 = vld [vmem:[#allocation9 + $0x78] sm:$0xff]
    %375 = vrot.lane.b32.xlu0 %v367, 127
    %v376 = vpop.permute.xlu0 %375
    %377 = vrot.lane.b32.xlu0 %v368, 127
    %v378 = vpop.permute.xlu0 %377
    %379 = vrot.lane.b32.xlu0 %v369, 127
    %v380 = vpop.permute.xlu0 %379
    %381 = vrot.lane.b32.xlu0 %v370, 127
    %v382 = vpop.permute.xlu0 %381
    %vm383 = vcmask 1039360
    %v384 = vsel %vm383, %v376, %v378
    %v385 = vsel %vm383, %v378, %v380
    %v386 = vsel %vm383, %v380, %v382
    %v392 = vmul.f32 %v362, %v376
    %v393 = vmul.f32 %v363, %v384
    %v394 = vmul.f32 %v364, %v385
    %v395 = vmul.f32 %v365, %v386
    %v396 = vmul.f32 %v366, %v382
    %402 = vrot.lane.b32.xlu0 %v392, 1
    %v403 = vpop.permute.xlu0 %402
    %404 = vrot.lane.b32.xlu0 %v393, 1
    %v405 = vpop.permute.xlu0 %404
    %406 = vrot.lane.b32.xlu0 %v394, 1
    %v407 = vpop.permute.xlu0 %406
    %408 = vrot.lane.b32.xlu0 %v395, 1
    %v409 = vpop.permute.xlu0 %408
    %410 = vrot.lane.b32.xlu0 %v396, 1
    %v411 = vpop.permute.xlu0 %410
    %vm412 = vcmask 7168
    %v413 = vsel %vm412, %v403, %v405
    %v414 = vsel %vm412, %v405, %v407
    %v415 = vsel %vm412, %v407, %v409
    %v416 = vsel %vm412, %v409, %v411
    %421 = vst [vmem:[#allocation3 + $0x60] sm:$0xff] %v413
    %422 = vst [vmem:[#allocation3 + $0x68] sm:$0xff] %v414
    %423 = vst [vmem:[#allocation3 + $0x70] sm:$0xff] %v415
    %424 = vst [vmem:[#allocation3 + $0x78] sm:$0xff] %v416
    %v425 = vld [vmem:[#allocation2 + $0x8] sm:$0xff]
    %v426 = vld [vmem:[#allocation2 + $0x10] sm:$0xff]
    %v427 = vld [vmem:[#allocation2 + $0x18] sm:$0xff]
    %v428 = vld [vmem:[#allocation2 + $0x20] sm:$0xff]
    %429 = vst [vmem:[#allocation3 + $0x80] sm:$0xff] %v425
    %430 = vst [vmem:[#allocation3 + $0x88] sm:$0xff] %v426
    %431 = vst [vmem:[#allocation3 + $0x90] sm:$0xff] %v427
    %432 = vst [vmem:[#allocation3 + $0x98] sm:$0xff] %v428
    %v433 = vld [vmem:[#allocation2 + $0x8] sm:$0xff]
    %v434 = vld [vmem:[#allocation2 + $0x10] sm:$0xff]
    %v435 = vld [vmem:[#allocation2 + $0x18] sm:$0xff]
    %v436 = vld [vmem:[#allocation2 + $0x20] sm:$0xff]
    %v437 = vld [vmem:[#allocation2 + $0x28] sm:$0xff]
    %v438 = vld [vmem:[#allocation9 + $0xa0] sm:$0xff]
    %v439 = vld [vmem:[#allocation9 + $0xa8] sm:$0xff]
    %v440 = vld [vmem:[#allocation9 + $0xb0] sm:$0xff]
    %v441 = vld [vmem:[#allocation9 + $0xb8] sm:$0xff]
    %446 = vrot.lane.b32.xlu0 %v438, 1
    %v447 = vpop.permute.xlu0 %446
    %448 = vrot.lane.b32.xlu0 %v439, 1
    %v449 = vpop.permute.xlu0 %448
    %450 = vrot.lane.b32.xlu0 %v440, 1
    %v451 = vpop.permute.xlu0 %450
    %452 = vrot.lane.b32.xlu0 %v441, 1
    %v453 = vpop.permute.xlu0 %452
    %v454 = vsel %vm412, %v447, %v449
    %v455 = vsel %vm412, %v449, %v451
    %v456 = vsel %vm412, %v451, %v453
    %v462 = vmul.f32 %v433, %v447
    %v463 = vmul.f32 %v434, %v454
    %v464 = vmul.f32 %v435, %v455
    %v465 = vmul.f32 %v436, %v456
    %v466 = vmul.f32 %v437, %v453
    %472 = vrot.lane.b32.xlu0 %v462, 127
    %v473 = vpop.permute.xlu0 %472
    %474 = vrot.lane.b32.xlu0 %v463, 127
    %v475 = vpop.permute.xlu0 %474
    %476 = vrot.lane.b32.xlu0 %v464, 127
    %v477 = vpop.permute.xlu0 %476
    %478 = vrot.lane.b32.xlu0 %v465, 127
    %v479 = vpop.permute.xlu0 %478
    %480 = vrot.lane.b32.xlu0 %v466, 127
    %v481 = vpop.permute.xlu0 %480
    %v482 = vsel %vm383, %v473, %v475
    %v483 = vsel %vm383, %v475, %v477
    %v484 = vsel %vm383, %v477, %v479
    %v485 = vsel %vm383, %v479, %v481
    %490 = vst [vmem:[#allocation3 + $0xa0] sm:$0xff] %v482
    %491 = vst [vmem:[#allocation3 + $0xa8] sm:$0xff] %v483
    %492 = vst [vmem:[#allocation3 + $0xb0] sm:$0xff] %v484
    %493 = vst [vmem:[#allocation3 + $0xb8] sm:$0xff] %v485
    %v494 = vld [vmem:[#allocation2 + $0x8] sm:$0xff]
    %v495 = vld [vmem:[#allocation2 + $0x10] sm:$0xff]
    %v496 = vld [vmem:[#allocation2 + $0x18] sm:$0xff]
    %v497 = vld [vmem:[#allocation2 + $0x20] sm:$0xff]
    %v498 = vld [vmem:[#allocation2 + $0x28] sm:$0xff]
    %v499 = vld [vmem:[#allocation9 + $0xc0] sm:$0xff]
    %v500 = vld [vmem:[#allocation9 + $0xc8] sm:$0xff]
    %v501 = vld [vmem:[#allocation9 + $0xd0] sm:$0xff]
    %v502 = vld [vmem:[#allocation9 + $0xd8] sm:$0xff]
    %507 = vrot.lane.b32.xlu0 %v499, 15
    %v508 = vpop.permute.xlu0 %507
    %509 = vrot.lane.b32.xlu0 %v500, 15
    %v510 = vpop.permute.xlu0 %509
    %511 = vrot.lane.b32.xlu0 %v501, 15
    %v512 = vpop.permute.xlu0 %511
    %513 = vrot.lane.b32.xlu0 %v502, 15
    %v514 = vpop.permute.xlu0 %513
    %v515 = vsel %vm349, %v508, %v510
    %v516 = vsel %vm349, %v510, %v512
    %v517 = vsel %vm349, %v512, %v514
    %v523 = vmul.f32 %v494, %v508
    %v524 = vmul.f32 %v495, %v515
    %v525 = vmul.f32 %v496, %v516
    %v526 = vmul.f32 %v497, %v517
    %v527 = vmul.f32 %v498, %v514
    %533 = vrot.lane.b32.xlu0 %v523, 113
    %v534 = vpop.permute.xlu0 %533
    %535 = vrot.lane.b32.xlu0 %v524, 113
    %v536 = vpop.permute.xlu0 %535
    %537 = vrot.lane.b32.xlu0 %v525, 113
    %v538 = vpop.permute.xlu0 %537
    %539 = vrot.lane.b32.xlu0 %v526, 113
    %v540 = vpop.permute.xlu0 %539
    %541 = vrot.lane.b32.xlu0 %v527, 113
    %v542 = vpop.permute.xlu0 %541
    %v543 = vsel %vm320, %v534, %v536
    %v544 = vsel %vm320, %v536, %v538
    %v545 = vsel %vm320, %v538, %v540
    %v546 = vsel %vm320, %v540, %v542
    %551 = vst [vmem:[#allocation3 + $0xc0] sm:$0xff] %v543
    %552 = vst [vmem:[#allocation3 + $0xc8] sm:$0xff] %v544
    %553 = vst [vmem:[#allocation3 + $0xd0] sm:$0xff] %v545
    %554 = vst [vmem:[#allocation3 + $0xd8] sm:$0xff] %v546
    %v555 = vld [vmem:[#allocation2 + $0x8] sm:$0xff]
    %v556 = vld [vmem:[#allocation2 + $0x10] sm:$0xff]
    %v557 = vld [vmem:[#allocation2 + $0x18] sm:$0xff]
    %v558 = vld [vmem:[#allocation2 + $0x20] sm:$0xff]
    %v559 = vld [vmem:[#allocation2 + $0x28] sm:$0xff]
    %v560 = vld [vmem:[#allocation9 + $0xe0] sm:$0xff]
    %v561 = vld [vmem:[#allocation9 + $0xe8] sm:$0xff]
    %v562 = vld [vmem:[#allocation9 + $0xf0] sm:$0xff]
    %v563 = vld [vmem:[#allocation9 + $0xf8] sm:$0xff]
    %568 = vrot.lane.b32.xlu0 %v560, 16
    %v569 = vpop.permute.xlu0 %568
    %570 = vrot.lane.b32.xlu0 %v561, 16
    %v571 = vpop.permute.xlu0 %570
    %572 = vrot.lane.b32.xlu0 %v562, 16
    %v573 = vpop.permute.xlu0 %572
    %574 = vrot.lane.b32.xlu0 %v563, 16
    %v575 = vpop.permute.xlu0 %574
    %v576 = vsel %vm286, %v569, %v571
    %v577 = vsel %vm286, %v571, %v573
    %v578 = vsel %vm286, %v573, %v575
    %v584 = vmul.f32 %v555, %v569
    %v585 = vmul.f32 %v556, %v576
    %v586 = vmul.f32 %v557, %v577
    %v587 = vmul.f32 %v558, %v578
    %v588 = vmul.f32 %v559, %v575
    %594 = vrot.lane.b32.xlu0 %v584, 112
    %v595 = vpop.permute.xlu0 %594
    %596 = vrot.lane.b32.xlu0 %v585, 112
    %v597 = vpop.permute.xlu0 %596
    %598 = vrot.lane.b32.xlu0 %v586, 112
    %v599 = vpop.permute.xlu0 %598
    %600 = vrot.lane.b32.xlu0 %v587, 112
    %v601 = vpop.permute.xlu0 %600
    %602 = vrot.lane.b32.xlu0 %v588, 112
    %v603 = vpop.permute.xlu0 %602
    %v604 = vsel %vm257, %v595, %v597
    %v605 = vsel %vm257, %v597, %v599
    %v606 = vsel %vm257, %v599, %v601
    %v607 = vsel %vm257, %v601, %v603
    %612 = vst [vmem:[#allocation3 + $0xe0] sm:$0xff] %v604
    %613 = vst [vmem:[#allocation3 + $0xe8] sm:$0xff] %v605
    %614 = vst [vmem:[#allocation3 + $0xf0] sm:$0xff] %v606
    %615 = vst [vmem:[#allocation3 + $0xf8] sm:$0xff] %v607
    %v616 = vld [vmem:[#allocation2 + $0x8] sm:$0xff]
    %v617 = vld [vmem:[#allocation2 + $0x10] sm:$0xff]
    %v618 = vld [vmem:[#allocation2 + $0x18] sm:$0xff]
    %v619 = vld [vmem:[#allocation2 + $0x20] sm:$0xff]
    %v620 = vld [vmem:[#allocation2 + $0x28] sm:$0xff]
    %v621 = vld [vmem:[#allocation9 + $0x100] sm:$0xff]
    %v622 = vld [vmem:[#allocation9 + $0x108] sm:$0xff]
    %v623 = vld [vmem:[#allocation9 + $0x110] sm:$0xff]
    %v624 = vld [vmem:[#allocation9 + $0x118] sm:$0xff]
    %629 = vrot.lane.b32.xlu0 %v621, 17
    %v630 = vpop.permute.xlu0 %629
    %631 = vrot.lane.b32.xlu0 %v622, 17
    %v632 = vpop.permute.xlu0 %631
    %633 = vrot.lane.b32.xlu0 %v623, 17
    %v634 = vpop.permute.xlu0 %633
    %635 = vrot.lane.b32.xlu0 %v624, 17
    %v636 = vpop.permute.xlu0 %635
    %v637 = vsel %vm223, %v630, %v632
    %v638 = vsel %vm223, %v632, %v634
    %v639 = vsel %vm223, %v634, %v636
    %v645 = vmul.f32 %v616, %v630
    %v646 = vmul.f32 %v617, %v637
    %v647 = vmul.f32 %v618, %v638
    %v648 = vmul.f32 %v619, %v639
    %v649 = vmul.f32 %v620, %v636
    %655 = vrot.lane.b32.xlu0 %v645, 111
    %v656 = vpop.permute.xlu0 %655
    %657 = vrot.lane.b32.xlu0 %v646, 111
    %v658 = vpop.permute.xlu0 %657
    %659 = vrot.lane.b32.xlu0 %v647, 111
    %v660 = vpop.permute.xlu0 %659
    %661 = vrot.lane.b32.xlu0 %v648, 111
    %v662 = vpop.permute.xlu0 %661
    %663 = vrot.lane.b32.xlu0 %v649, 111
    %v664 = vpop.permute.xlu0 %663
    %v665 = vsel %vm194, %v656, %v658
    %v666 = vsel %vm194, %v658, %v660
    %v667 = vsel %vm194, %v660, %v662
    %v668 = vsel %vm194, %v662, %v664
    %673 = vst [vmem:[#allocation3 + $0x100] sm:$0xff] %v665
    %674 = vst [vmem:[#allocation3 + $0x108] sm:$0xff] %v666
    %675 = vst [vmem:[#allocation3 + $0x110] sm:$0xff] %v667
    %676 = vst [vmem:[#allocation3 + $0x118] sm:$0xff] %v668
    %v677 = vld [vmem:[%s4] sm:$0xf]
    %v678 = vld [vmem:[#allocation3] sm:$0xff]
    %v679 = vld [vmem:[#allocation3 + $0x8] sm:$0xff]
    %v680 = vld [vmem:[#allocation3 + $0x10] sm:$0xff]
    %v681 = vld [vmem:[#allocation3 + $0x18] sm:$0xff]
    %v682 = vld [vmem:[#allocation3 + $0x20] sm:$0xff]
    %v683 = vld [vmem:[#allocation3 + $0x28] sm:$0xff]
    %v684 = vld [vmem:[#allocation3 + $0x30] sm:$0xff]
    %v685 = vld [vmem:[#allocation3 + $0x38] sm:$0xff]
    %v686 = vld [vmem:[#allocation3 + $0x40] sm:$0xff]
    %v687 = vld [vmem:[#allocation3 + $0x48] sm:$0xff]
    %v688 = vld [vmem:[#allocation3 + $0x50] sm:$0xff]
    %v689 = vld [vmem:[#allocation3 + $0x58] sm:$0xff]
    %v690 = vld [vmem:[#allocation3 + $0x60] sm:$0xff]
    %v691 = vld [vmem:[#allocation3 + $0x68] sm:$0xff]
    %v692 = vld [vmem:[#allocation3 + $0x70] sm:$0xff]
    %v693 = vld [vmem:[#allocation3 + $0x78] sm:$0xff]
    %v694 = vld [vmem:[#allocation3 + $0x80] sm:$0xff]
    %v695 = vld [vmem:[#allocation3 + $0x88] sm:$0xff]
    %v696 = vld [vmem:[#allocation3 + $0x90] sm:$0xff]
    %v697 = vld [vmem:[#allocation3 + $0x98] sm:$0xff]
    %v698 = vld [vmem:[#allocation3 + $0xa0] sm:$0xff]
    %v699 = vld [vmem:[#allocation3 + $0xa8] sm:$0xff]
    %v700 = vld [vmem:[#allocation3 + $0xb0] sm:$0xff]
    %v701 = vld [vmem:[#allocation3 + $0xb8] sm:$0xff]
    %v702 = vld [vmem:[#allocation3 + $0xc0] sm:$0xff]
    %v703 = vld [vmem:[#allocation3 + $0xc8] sm:$0xff]
    %v704 = vld [vmem:[#allocation3 + $0xd0] sm:$0xff]
    %v705 = vld [vmem:[#allocation3 + $0xd8] sm:$0xff]
    %v706 = vld [vmem:[#allocation3 + $0xe0] sm:$0xff]
    %v707 = vld [vmem:[#allocation3 + $0xe8] sm:$0xff]
    %v708 = vld [vmem:[#allocation3 + $0xf0] sm:$0xff]
    %v709 = vld [vmem:[#allocation3 + $0xf8] sm:$0xff]
    %v710 = vld [vmem:[#allocation3 + $0x100] sm:$0xff]
    %v711 = vld [vmem:[#allocation3 + $0x108] sm:$0xff]
    %v712 = vld [vmem:[#allocation3 + $0x110] sm:$0xff]
    %v713 = vld [vmem:[#allocation3 + $0x118] sm:$0xff]
    %vm714 = vcmask 588800
    %v716 = vsel %vm714, %v677, 0
    %718 = vmatpush.msra.mxu0 0.0
    %719 = vmatpush.msra.mxu0 0.0
    %720 = vmatpush.msra.mxu0 0.0
    %721 = vmatpush.msra.mxu0 0.0
    %722 = vmatpush.msra.mxu0 0.0
    %723 = vmatpush.msra.mxu0 0.0
    %724 = vmatpush.msra.mxu0 0.0
    %725 = vmatpush.msra.mxu0 %v710
    %726 = vmatpush.msra.mxu0 %v706
    %727 = vmatpush.msra.mxu0 %v702
    %728 = vmatpush.msra.mxu0 %v698
    %729 = vmatpush.msra.mxu0 %v694
    %730 = vmatpush.msra.mxu0 %v690
    %731 = vmatpush.msra.mxu0 %v686
    %732 = vmatpush.msra.mxu0 %v682
    %733 = vmatpush.msra.mxu0 %v678
    %734 = vmatmul.f32.gmra.mxu0 %v716
    %v735 = vpop.f32.mrf.mxu0
    %v736 = vadd.f32 0.0, %v735
    %737 = vdwg.mxu0
    %738 = vmatpush.msra.mxu0 0.0
    %739 = vmatpush.msra.mxu0 0.0
    %740 = vmatpush.msra.mxu0 0.0
    %741 = vmatpush.msra.mxu0 0.0
    %742 = vmatpush.msra.mxu0 0.0
    %743 = vmatpush.msra.mxu0 0.0
    %744 = vmatpush.msra.mxu0 0.0
    %745 = vmatpush.msra.mxu0 %v711
    %746 = vmatpush.msra.mxu0 %v707
    %747 = vmatpush.msra.mxu0 %v703
    %748 = vmatpush.msra.mxu0 %v699
    %749 = vmatpush.msra.mxu0 %v695
    %750 = vmatpush.msra.mxu0 %v691
    %751 = vmatpush.msra.mxu0 %v687
    %752 = vmatpush.msra.mxu0 %v683
    %753 = vmatpush.msra.mxu0 %v679
    %754 = vmatmul.f32.gmra.mxu0 %v716
    %v755 = vpop.f32.mrf.mxu0
    %v756 = vadd.f32 0.0, %v755
    %757 = vdwg.mxu0
    %758 = vmatpush.msra.mxu0 0.0
    %759 = vmatpush.msra.mxu0 0.0
    %760 = vmatpush.msra.mxu0 0.0
    %761 = vmatpush.msra.mxu0 0.0
    %762 = vmatpush.msra.mxu0 0.0
    %763 = vmatpush.msra.mxu0 0.0
    %764 = vmatpush.msra.mxu0 0.0
    %765 = vmatpush.msra.mxu0 %v712
    %766 = vmatpush.msra.mxu0 %v708
    %767 = vmatpush.msra.mxu0 %v704
    %768 = vmatpush.msra.mxu0 %v700
    %769 = vmatpush.msra.mxu0 %v696
    %770 = vmatpush.msra.mxu0 %v692
    %771 = vmatpush.msra.mxu0 %v688
    %772 = vmatpush.msra.mxu0 %v684
    %773 = vmatpush.msra.mxu0 %v680
    %774 = vmatmul.f32.gmra.mxu0 %v716
    %v775 = vpop.f32.mrf.mxu0
    %v776 = vadd.f32 0.0, %v775
    %777 = vdwg.mxu0
    %778 = vmatpush.msra.mxu0 0.0
    %779 = vmatpush.msra.mxu0 0.0
    %780 = vmatpush.msra.mxu0 0.0
    %781 = vmatpush.msra.mxu0 0.0
    %782 = vmatpush.msra.mxu0 0.0
    %783 = vmatpush.msra.mxu0 0.0
    %784 = vmatpush.msra.mxu0 0.0
    %785 = vmatpush.msra.mxu0 %v713
    %786 = vmatpush.msra.mxu0 %v709
    %787 = vmatpush.msra.mxu0 %v705
    %788 = vmatpush.msra.mxu0 %v701
    %789 = vmatpush.msra.mxu0 %v697
    %790 = vmatpush.msra.mxu0 %v693
    %791 = vmatpush.msra.mxu0 %v689
    %792 = vmatpush.msra.mxu0 %v685
    %793 = vmatpush.msra.mxu0 %v681
    %794 = vmatmul.f32.gmra.mxu0 %v716
    %v795 = vpop.f32.mrf.mxu0
    %v796 = vadd.f32 0.0, %v795
    %797 = vdwg.mxu0
    %v798 = vld [vmem:[%s5] sm:$0xf]
    %800 = vset.pattern.permute.xlu0 0
    %801 = vperm.xlu0 %800, %v798
    %v802 = vpop.permute.xlu0 %801
    %v804 = vmul.f32 %v736, %v802
    %v805 = vmul.f32 %v756, %v802
    %v806 = vmul.f32 %v776, %v802
    %v807 = vmul.f32 %v796, %v802
    %v808 = vld [vmem:[%s6] sm:$0xf]
    %810 = vset.pattern.permute.xlu0 0
    %811 = vperm.xlu0 %810, %v808
    %v812 = vpop.permute.xlu0 %811
    %v814 = vadd.f32 %v804, %v812
    %v815 = vadd.f32 %v805, %v812
    %v816 = vadd.f32 %v806, %v812
    %v817 = vadd.f32 %v807, %v812
    %v818 = vmax.f32 %v814, 0.0
    %v819 = vmax.f32 %v815, 0.0
    %v820 = vmax.f32 %v816, 0.0
    %v821 = vmax.f32 %v817, 0.0
    %822 = vst [vmem:[#allocation2 + $0x8] sm:$0xf] %v818
    %823 = vst [vmem:[#allocation2 + $0x10] sm:$0xf] %v819
    %824 = vst [vmem:[#allocation2 + $0x18] sm:$0xf] %v820
    %825 = vst [vmem:[#allocation2 + $0x20] sm:$0xf] %v821
    %826 = vst [vmem:[#allocation2 + $0x8] sm:$0xf0] 0.0
    %827 = vst [vmem:[#allocation2 + $0x10] sm:$0xf0] 0.0
    %828 = vst [vmem:[#allocation2 + $0x18] sm:$0xf0] 0.0
    %829 = vst [vmem:[#allocation2 + $0x20] sm:$0xf0] 0.0
    %v830 = vld [vmem:[#allocation2] sm:$0xff]
    %v831 = vld [vmem:[#allocation2 + $0x8] sm:$0xff]
    %v832 = vld [vmem:[#allocation2 + $0x10] sm:$0xff]
    %v833 = vld [vmem:[#allocation2 + $0x18] sm:$0xff]
    %v834 = vld [vmem:[#allocation2 + $0x20] sm:$0xff]
    %v835 = vld [vmem:[#allocation9] sm:$0xff]
    %v836 = vld [vmem:[#allocation9 + $0x8] sm:$0xff]
    %v837 = vld [vmem:[#allocation9 + $0x10] sm:$0xff]
    %v838 = vld [vmem:[#allocation9 + $0x18] sm:$0xff]
    %843 = vrot.lane.b32.xlu0 %v835, 111
    %v844 = vpop.permute.xlu0 %843
    %845 = vrot.lane.b32.xlu0 %v836, 111
    %v846 = vpop.permute.xlu0 %845
    %847 = vrot.lane.b32.xlu0 %v837, 111
    %v848 = vpop.permute.xlu0 %847
    %849 = vrot.lane.b32.xlu0 %v838, 111
    %v850 = vpop.permute.xlu0 %849
    %v851 = vsel %vm194, %v844, %v846
    %v852 = vsel %vm194, %v846, %v848
    %v853 = vsel %vm194, %v848, %v850
    %v859 = vmul.f32 %v830, %v844
    %v860 = vmul.f32 %v831, %v851
    %v861 = vmul.f32 %v832, %v852
    %v862 = vmul.f32 %v833, %v853
    %v863 = vmul.f32 %v834, %v850
    %869 = vrot.lane.b32.xlu0 %v859, 17
    %v870 = vpop.permute.xlu0 %869
    %871 = vrot.lane.b32.xlu0 %v860, 17
    %v872 = vpop.permute.xlu0 %871
    %873 = vrot.lane.b32.xlu0 %v861, 17
    %v874 = vpop.permute.xlu0 %873
    %875 = vrot.lane.b32.xlu0 %v862, 17
    %v876 = vpop.permute.xlu0 %875
    %877 = vrot.lane.b32.xlu0 %v863, 17
    %v878 = vpop.permute.xlu0 %877
    %v879 = vsel %vm223, %v870, %v872
    %v880 = vsel %vm223, %v872, %v874
    %v881 = vsel %vm223, %v874, %v876
    %v882 = vsel %vm223, %v876, %v878
    %887 = vst [vmem:[#allocation3] sm:$0xff] %v879
    %888 = vst [vmem:[#allocation3 + $0x8] sm:$0xff] %v880
    %889 = vst [vmem:[#allocation3 + $0x10] sm:$0xff] %v881
    %890 = vst [vmem:[#allocation3 + $0x18] sm:$0xff] %v882
    %v891 = vld [vmem:[#allocation2] sm:$0xff]
    %v892 = vld [vmem:[#allocation2 + $0x8] sm:$0xff]
    %v893 = vld [vmem:[#allocation2 + $0x10] sm:$0xff]
    %v894 = vld [vmem:[#allocation2 + $0x18] sm:$0xff]
    %v895 = vld [vmem:[#allocation2 + $0x20] sm:$0xff]
    %v896 = vld [vmem:[#allocation9 + $0x20] sm:$0xff]
    %v897 = vld [vmem:[#allocation9 + $0x28] sm:$0xff]
    %v898 = vld [vmem:[#allocation9 + $0x30] sm:$0xff]
    %v899 = vld [vmem:[#allocation9 + $0x38] sm:$0xff]
    %904 = vrot.lane.b32.xlu0 %v896, 112
    %v905 = vpop.permute.xlu0 %904
    %906 = vrot.lane.b32.xlu0 %v897, 112
    %v907 = vpop.permute.xlu0 %906
    %908 = vrot.lane.b32.xlu0 %v898, 112
    %v909 = vpop.permute.xlu0 %908
    %910 = vrot.lane.b32.xlu0 %v899, 112
    %v911 = vpop.permute.xlu0 %910
    %v912 = vsel %vm257, %v905, %v907
    %v913 = vsel %vm257, %v907, %v909
    %v914 = vsel %vm257, %v909, %v911
    %v920 = vmul.f32 %v891, %v905
    %v921 = vmul.f32 %v892, %v912
    %v922 = vmul.f32 %v893, %v913
    %v923 = vmul.f32 %v894, %v914
    %v924 = vmul.f32 %v895, %v911
    %930 = vrot.lane.b32.xlu0 %v920, 16
    %v931 = vpop.permute.xlu0 %930
    %932 = vrot.lane.b32.xlu0 %v921, 16
    %v933 = vpop.permute.xlu0 %932
    %934 = vrot.lane.b32.xlu0 %v922, 16
    %v935 = vpop.permute.xlu0 %934
    %936 = vrot.lane.b32.xlu0 %v923, 16
    %v937 = vpop.permute.xlu0 %936
    %938 = vrot.lane.b32.xlu0 %v924, 16
    %v939 = vpop.permute.xlu0 %938
    %v940 = vsel %vm286, %v931, %v933
    %v941 = vsel %vm286, %v933, %v935
    %v942 = vsel %vm286, %v935, %v937
    %v943 = vsel %vm286, %v937, %v939
    %948 = vst [vmem:[#allocation3 + $0x20] sm:$0xff] %v940
    %949 = vst [vmem:[#allocation3 + $0x28] sm:$0xff] %v941
    %950 = vst [vmem:[#allocation3 + $0x30] sm:$0xff] %v942
    %951 = vst [vmem:[#allocation3 + $0x38] sm:$0xff] %v943
    %v952 = vld [vmem:[#allocation2] sm:$0xff]
    %v953 = vld [vmem:[#allocation2 + $0x8] sm:$0xff]
    %v954 = vld [vmem:[#allocation2 + $0x10] sm:$0xff]
    %v955 = vld [vmem:[#allocation2 + $0x18] sm:$0xff]
    %v956 = vld [vmem:[#allocation2 + $0x20] sm:$0xff]
    %v957 = vld [vmem:[#allocation9 + $0x40] sm:$0xff]
    %v958 = vld [vmem:[#allocation9 + $0x48] sm:$0xff]
    %v959 = vld [vmem:[#allocation9 + $0x50] sm:$0xff]
    %v960 = vld [vmem:[#allocation9 + $0x58] sm:$0xff]
    %965 = vrot.lane.b32.xlu0 %v957, 113
    %v966 = vpop.permute.xlu0 %965
    %967 = vrot.lane.b32.xlu0 %v958, 113
    %v968 = vpop.permute.xlu0 %967
    %969 = vrot.lane.b32.xlu0 %v959, 113
    %v970 = vpop.permute.xlu0 %969
    %971 = vrot.lane.b32.xlu0 %v960, 113
    %v972 = vpop.permute.xlu0 %971
    %v973 = vsel %vm320, %v966, %v968
    %v974 = vsel %vm320, %v968, %v970
    %v975 = vsel %vm320, %v970, %v972
    %v981 = vmul.f32 %v952, %v966
    %v982 = vmul.f32 %v953, %v973
    %v983 = vmul.f32 %v954, %v974
    %v984 = vmul.f32 %v955, %v975
    %v985 = vmul.f32 %v956, %v972
    %991 = vrot.lane.b32.xlu0 %v981, 15
    %v992 = vpop.permute.xlu0 %991
    %993 = vrot.lane.b32.xlu0 %v982, 15
    %v994 = vpop.permute.xlu0 %993
    %995 = vrot.lane.b32.xlu0 %v983, 15
    %v996 = vpop.permute.xlu0 %995
    %997 = vrot.lane.b32.xlu0 %v984, 15
    %v998 = vpop.permute.xlu0 %997
    %999 = vrot.lane.b32.xlu0 %v985, 15
    %v1000 = vpop.permute.xlu0 %999
    %v1001 = vsel %vm349, %v992, %v994
    %v1002 = vsel %vm349, %v994, %v996
    %v1003 = vsel %vm349, %v996, %v998
    %v1004 = vsel %vm349, %v998, %v1000
    %1009 = vst [vmem:[#allocation3 + $0x40] sm:$0xff] %v1001
    %1010 = vst [vmem:[#allocation3 + $0x48] sm:$0xff] %v1002
    %1011 = vst [vmem:[#allocation3 + $0x50] sm:$0xff] %v1003
    %1012 = vst [vmem:[#allocation3 + $0x58] sm:$0xff] %v1004
    %v1013 = vld [vmem:[#allocation2] sm:$0xff]
    %v1014 = vld [vmem:[#allocation2 + $0x8] sm:$0xff]
    %v1015 = vld [vmem:[#allocation2 + $0x10] sm:$0xff]
    %v1016 = vld [vmem:[#allocation2 + $0x18] sm:$0xff]
    %v1017 = vld [vmem:[#allocation2 + $0x20] sm:$0xff]
    %v1018 = vld [vmem:[#allocation9 + $0x60] sm:$0xff]
    %v1019 = vld [vmem:[#allocation9 + $0x68] sm:$0xff]
    %v1020 = vld [vmem:[#allocation9 + $0x70] sm:$0xff]
    %v1021 = vld [vmem:[#allocation9 + $0x78] sm:$0xff]
    %1026 = vrot.lane.b32.xlu0 %v1018, 127
    %v1027 = vpop.permute.xlu0 %1026
    %1028 = vrot.lane.b32.xlu0 %v1019, 127
    %v1029 = vpop.permute.xlu0 %1028
    %1030 = vrot.lane.b32.xlu0 %v1020, 127
    %v1031 = vpop.permute.xlu0 %1030
    %1032 = vrot.lane.b32.xlu0 %v1021, 127
    %v1033 = vpop.permute.xlu0 %1032
    %v1034 = vsel %vm383, %v1027, %v1029
    %v1035 = vsel %vm383, %v1029, %v1031
    %v1036 = vsel %vm383, %v1031, %v1033
    %v1042 = vmul.f32 %v1013, %v1027
    %v1043 = vmul.f32 %v1014, %v1034
    %v1044 = vmul.f32 %v1015, %v1035
    %v1045 = vmul.f32 %v1016, %v1036
    %v1046 = vmul.f32 %v1017, %v1033
    %1052 = vrot.lane.b32.xlu0 %v1042, 1
    %v1053 = vpop.permute.xlu0 %1052
    %1054 = vrot.lane.b32.xlu0 %v1043, 1
    %v1055 = vpop.permute.xlu0 %1054
    %1056 = vrot.lane.b32.xlu0 %v1044, 1
    %v1057 = vpop.permute.xlu0 %1056
    %1058 = vrot.lane.b32.xlu0 %v1045, 1
    %v1059 = vpop.permute.xlu0 %1058
    %1060 = vrot.lane.b32.xlu0 %v1046, 1
    %v1061 = vpop.permute.xlu0 %1060
    %v1062 = vsel %vm412, %v1053, %v1055
    %v1063 = vsel %vm412, %v1055, %v1057
    %v1064 = vsel %vm412, %v1057, %v1059
    %v1065 = vsel %vm412, %v1059, %v1061
    %1070 = vst [vmem:[#allocation3 + $0x60] sm:$0xff] %v1062
    %1071 = vst [vmem:[#allocation3 + $0x68] sm:$0xff] %v1063
    %1072 = vst [vmem:[#allocation3 + $0x70] sm:$0xff] %v1064
    %1073 = vst [vmem:[#allocation3 + $0x78] sm:$0xff] %v1065
    %v1074 = vld [vmem:[#allocation2 + $0x8] sm:$0xff]
    %v1075 = vld [vmem:[#allocation2 + $0x10] sm:$0xff]
    %v1076 = vld [vmem:[#allocation2 + $0x18] sm:$0xff]
    %v1077 = vld [vmem:[#allocation2 + $0x20] sm:$0xff]
    %1078 = vst [vmem:[#allocation3 + $0x80] sm:$0xff] %v1074
    %1079 = vst [vmem:[#allocation3 + $0x88] sm:$0xff] %v1075
    %1080 = vst [vmem:[#allocation3 + $0x90] sm:$0xff] %v1076
    %1081 = vst [vmem:[#allocation3 + $0x98] sm:$0xff] %v1077
    %v1082 = vld [vmem:[#allocation2 + $0x8] sm:$0xff]
    %v1083 = vld [vmem:[#allocation2 + $0x10] sm:$0xff]
    %v1084 = vld [vmem:[#allocation2 + $0x18] sm:$0xff]
    %v1085 = vld [vmem:[#allocation2 + $0x20] sm:$0xff]
    %v1086 = vld [vmem:[#allocation2 + $0x28] sm:$0xff]
    %v1087 = vld [vmem:[#allocation9 + $0xa0] sm:$0xff]
    %v1088 = vld [vmem:[#allocation9 + $0xa8] sm:$0xff]
    %v1089 = vld [vmem:[#allocation9 + $0xb0] sm:$0xff]
    %v1090 = vld [vmem:[#allocation9 + $0xb8] sm:$0xff]
    %1095 = vrot.lane.b32.xlu0 %v1087, 1
    %v1096 = vpop.permute.xlu0 %1095
    %1097 = vrot.lane.b32.xlu0 %v1088, 1
    %v1098 = vpop.permute.xlu0 %1097
    %1099 = vrot.lane.b32.xlu0 %v1089, 1
    %v1100 = vpop.permute.xlu0 %1099
    %1101 = vrot.lane.b32.xlu0 %v1090, 1
    %v1102 = vpop.permute.xlu0 %1101
    %v1103 = vsel %vm412, %v1096, %v1098
    %v1104 = vsel %vm412, %v1098, %v1100
    %v1105 = vsel %vm412, %v1100, %v1102
    %v1111 = vmul.f32 %v1082, %v1096
    %v1112 = vmul.f32 %v1083, %v1103
    %v1113 = vmul.f32 %v1084, %v1104
    %v1114 = vmul.f32 %v1085, %v1105
    %v1115 = vmul.f32 %v1086, %v1102
    %1121 = vrot.lane.b32.xlu0 %v1111, 127
    %v1122 = vpop.permute.xlu0 %1121
    %1123 = vrot.lane.b32.xlu0 %v1112, 127
    %v1124 = vpop.permute.xlu0 %1123
    %1125 = vrot.lane.b32.xlu0 %v1113, 127
    %v1126 = vpop.permute.xlu0 %1125
    %1127 = vrot.lane.b32.xlu0 %v1114, 127
    %v1128 = vpop.permute.xlu0 %1127
    %1129 = vrot.lane.b32.xlu0 %v1115, 127
    %v1130 = vpop.permute.xlu0 %1129
    %v1131 = vsel %vm383, %v1122, %v1124
    %v1132 = vsel %vm383, %v1124, %v1126
    %v1133 = vsel %vm383, %v1126, %v1128
    %v1134 = vsel %vm383, %v1128, %v1130
    %1139 = vst [vmem:[#allocation3 + $0xa0] sm:$0xff] %v1131
    %1140 = vst [vmem:[#allocation3 + $0xa8] sm:$0xff] %v1132
    %1141 = vst [vmem:[#allocation3 + $0xb0] sm:$0xff] %v1133
    %1142 = vst [vmem:[#allocation3 + $0xb8] sm:$0xff] %v1134
    %v1143 = vld [vmem:[#allocation2 + $0x8] sm:$0xff]
    %v1144 = vld [vmem:[#allocation2 + $0x10] sm:$0xff]
    %v1145 = vld [vmem:[#allocation2 + $0x18] sm:$0xff]
    %v1146 = vld [vmem:[#allocation2 + $0x20] sm:$0xff]
    %v1147 = vld [vmem:[#allocation2 + $0x28] sm:$0xff]
    %v1148 = vld [vmem:[#allocation9 + $0xc0] sm:$0xff]
    %v1149 = vld [vmem:[#allocation9 + $0xc8] sm:$0xff]
    %v1150 = vld [vmem:[#allocation9 + $0xd0] sm:$0xff]
    %v1151 = vld [vmem:[#allocation9 + $0xd8] sm:$0xff]
    %1156 = vrot.lane.b32.xlu0 %v1148, 15
    %v1157 = vpop.permute.xlu0 %1156
    %1158 = vrot.lane.b32.xlu0 %v1149, 15
    %v1159 = vpop.permute.xlu0 %1158
    %1160 = vrot.lane.b32.xlu0 %v1150, 15
    %v1161 = vpop.permute.xlu0 %1160
    %1162 = vrot.lane.b32.xlu0 %v1151, 15
    %v1163 = vpop.permute.xlu0 %1162
    %v1164 = vsel %vm349, %v1157, %v1159
    %v1165 = vsel %vm349, %v1159, %v1161
    %v1166 = vsel %vm349, %v1161, %v1163
    %v1172 = vmul.f32 %v1143, %v1157
    %v1173 = vmul.f32 %v1144, %v1164
    %v1174 = vmul.f32 %v1145, %v1165
    %v1175 = vmul.f32 %v1146, %v1166
    %v1176 = vmul.f32 %v1147, %v1163
    %1182 = vrot.lane.b32.xlu0 %v1172, 113
    %v1183 = vpop.permute.xlu0 %1182
    %1184 = vrot.lane.b32.xlu0 %v1173, 113
    %v1185 = vpop.permute.xlu0 %1184
    %1186 = vrot.lane.b32.xlu0 %v1174, 113
    %v1187 = vpop.permute.xlu0 %1186
    %1188 = vrot.lane.b32.xlu0 %v1175, 113
    %v1189 = vpop.permute.xlu0 %1188
    %1190 = vrot.lane.b32.xlu0 %v1176, 113
    %v1191 = vpop.permute.xlu0 %1190
    %v1192 = vsel %vm320, %v1183, %v1185
    %v1193 = vsel %vm320, %v1185, %v1187
    %v1194 = vsel %vm320, %v1187, %v1189
    %v1195 = vsel %vm320, %v1189, %v1191
    %1200 = vst [vmem:[#allocation3 + $0xc0] sm:$0xff] %v1192
    %1201 = vst [vmem:[#allocation3 + $0xc8] sm:$0xff] %v1193
    %1202 = vst [vmem:[#allocation3 + $0xd0] sm:$0xff] %v1194
    %1203 = vst [vmem:[#allocation3 + $0xd8] sm:$0xff] %v1195
    %v1204 = vld [vmem:[#allocation2 + $0x8] sm:$0xff]
    %v1205 = vld [vmem:[#allocation2 + $0x10] sm:$0xff]
    %v1206 = vld [vmem:[#allocation2 + $0x18] sm:$0xff]
    %v1207 = vld [vmem:[#allocation2 + $0x20] sm:$0xff]
    %v1208 = vld [vmem:[#allocation2 + $0x28] sm:$0xff]
    %v1209 = vld [vmem:[#allocation9 + $0xe0] sm:$0xff]
    %v1210 = vld [vmem:[#allocation9 + $0xe8] sm:$0xff]
    %v1211 = vld [vmem:[#allocation9 + $0xf0] sm:$0xff]
    %v1212 = vld [vmem:[#allocation9 + $0xf8] sm:$0xff]
    %1217 = vrot.lane.b32.xlu0 %v1209, 16
    %v1218 = vpop.permute.xlu0 %1217
    %1219 = vrot.lane.b32.xlu0 %v1210, 16
    %v1220 = vpop.permute.xlu0 %1219
    %1221 = vrot.lane.b32.xlu0 %v1211, 16
    %v1222 = vpop.permute.xlu0 %1221
    %1223 = vrot.lane.b32.xlu0 %v1212, 16
    %v1224 = vpop.permute.xlu0 %1223
    %v1225 = vsel %vm286, %v1218, %v1220
    %v1226 = vsel %vm286, %v1220, %v1222
    %v1227 = vsel %vm286, %v1222, %v1224
    %v1233 = vmul.f32 %v1204, %v1218
    %v1234 = vmul.f32 %v1205, %v1225
    %v1235 = vmul.f32 %v1206, %v1226
    %v1236 = vmul.f32 %v1207, %v1227
    %v1237 = vmul.f32 %v1208, %v1224
    %1243 = vrot.lane.b32.xlu0 %v1233, 112
    %v1244 = vpop.permute.xlu0 %1243
    %1245 = vrot.lane.b32.xlu0 %v1234, 112
    %v1246 = vpop.permute.xlu0 %1245
    %1247 = vrot.lane.b32.xlu0 %v1235, 112
    %v1248 = vpop.permute.xlu0 %1247
    %1249 = vrot.lane.b32.xlu0 %v1236, 112
    %v1250 = vpop.permute.xlu0 %1249
    %1251 = vrot.lane.b32.xlu0 %v1237, 112
    %v1252 = vpop.permute.xlu0 %1251
    %v1253 = vsel %vm257, %v1244, %v1246
    %v1254 = vsel %vm257, %v1246, %v1248
    %v1255 = vsel %vm257, %v1248, %v1250
    %v1256 = vsel %vm257, %v1250, %v1252
    %1261 = vst [vmem:[#allocation3 + $0xe0] sm:$0xff] %v1253
    %1262 = vst [vmem:[#allocation3 + $0xe8] sm:$0xff] %v1254
    %1263 = vst [vmem:[#allocation3 + $0xf0] sm:$0xff] %v1255
    %1264 = vst [vmem:[#allocation3 + $0xf8] sm:$0xff] %v1256
    %v1265 = vld [vmem:[#allocation2 + $0x8] sm:$0xff]
    %v1266 = vld [vmem:[#allocation2 + $0x10] sm:$0xff]
    %v1267 = vld [vmem:[#allocation2 + $0x18] sm:$0xff]
    %v1268 = vld [vmem:[#allocation2 + $0x20] sm:$0xff]
    %v1269 = vld [vmem:[#allocation2 + $0x28] sm:$0xff]
    %v1270 = vld [vmem:[#allocation9 + $0x100] sm:$0xff]
    %v1271 = vld [vmem:[#allocation9 + $0x108] sm:$0xff]
    %v1272 = vld [vmem:[#allocation9 + $0x110] sm:$0xff]
    %v1273 = vld [vmem:[#allocation9 + $0x118] sm:$0xff]
    %1278 = vrot.lane.b32.xlu0 %v1270, 17
    %v1279 = vpop.permute.xlu0 %1278
    %1280 = vrot.lane.b32.xlu0 %v1271, 17
    %v1281 = vpop.permute.xlu0 %1280
    %1282 = vrot.lane.b32.xlu0 %v1272, 17
    %v1283 = vpop.permute.xlu0 %1282
    %1284 = vrot.lane.b32.xlu0 %v1273, 17
    %v1285 = vpop.permute.xlu0 %1284
    %v1286 = vsel %vm223, %v1279, %v1281
    %v1287 = vsel %vm223, %v1281, %v1283
    %v1288 = vsel %vm223, %v1283, %v1285
    %v1294 = vmul.f32 %v1265, %v1279
    %v1295 = vmul.f32 %v1266, %v1286
    %v1296 = vmul.f32 %v1267, %v1287
    %v1297 = vmul.f32 %v1268, %v1288
    %v1298 = vmul.f32 %v1269, %v1285
    %1304 = vrot.lane.b32.xlu0 %v1294, 111
    %v1305 = vpop.permute.xlu0 %1304
    %1306 = vrot.lane.b32.xlu0 %v1295, 111
    %v1307 = vpop.permute.xlu0 %1306
    %1308 = vrot.lane.b32.xlu0 %v1296, 111
    %v1309 = vpop.permute.xlu0 %1308
    %1310 = vrot.lane.b32.xlu0 %v1297, 111
    %v1311 = vpop.permute.xlu0 %1310
    %1312 = vrot.lane.b32.xlu0 %v1298, 111
    %v1313 = vpop.permute.xlu0 %1312
    %v1314 = vsel %vm194, %v1305, %v1307
    %v1315 = vsel %vm194, %v1307, %v1309
    %v1316 = vsel %vm194, %v1309, %v1311
    %v1317 = vsel %vm194, %v1311, %v1313
    %1322 = vst [vmem:[#allocation3 + $0x100] sm:$0xff] %v1314
    %1323 = vst [vmem:[#allocation3 + $0x108] sm:$0xff] %v1315
    %1324 = vst [vmem:[#allocation3 + $0x110] sm:$0xff] %v1316
    %1325 = vst [vmem:[#allocation3 + $0x118] sm:$0xff] %v1317
    %v1326 = vld [vmem:[%s7] sm:$0xf]
    %v1327 = vld [vmem:[#allocation3] sm:$0xff]
    %v1328 = vld [vmem:[#allocation3 + $0x8] sm:$0xff]
    %v1329 = vld [vmem:[#allocation3 + $0x10] sm:$0xff]
    %v1330 = vld [vmem:[#allocation3 + $0x18] sm:$0xff]
    %v1331 = vld [vmem:[#allocation3 + $0x20] sm:$0xff]
    %v1332 = vld [vmem:[#allocation3 + $0x28] sm:$0xff]
    %v1333 = vld [vmem:[#allocation3 + $0x30] sm:$0xff]
    %v1334 = vld [vmem:[#allocation3 + $0x38] sm:$0xff]
    %v1335 = vld [vmem:[#allocation3 + $0x40] sm:$0xff]
    %v1336 = vld [vmem:[#allocation3 + $0x48] sm:$0xff]
    %v1337 = vld [vmem:[#allocation3 + $0x50] sm:$0xff]
    %v1338 = vld [vmem:[#allocation3 + $0x58] sm:$0xff]
    %v1339 = vld [vmem:[#allocation3 + $0x60] sm:$0xff]
    %v1340 = vld [vmem:[#allocation3 + $0x68] sm:$0xff]
    %v1341 = vld [vmem:[#allocation3 + $0x70] sm:$0xff]
    %v1342 = vld [vmem:[#allocation3 + $0x78] sm:$0xff]
    %v1343 = vld [vmem:[#allocation3 + $0x80] sm:$0xff]
    %v1344 = vld [vmem:[#allocation3 + $0x88] sm:$0xff]
    %v1345 = vld [vmem:[#allocation3 + $0x90] sm:$0xff]
    %v1346 = vld [vmem:[#allocation3 + $0x98] sm:$0xff]
    %v1347 = vld [vmem:[#allocation3 + $0xa0] sm:$0xff]
    %v1348 = vld [vmem:[#allocation3 + $0xa8] sm:$0xff]
    %v1349 = vld [vmem:[#allocation3 + $0xb0] sm:$0xff]
    %v1350 = vld [vmem:[#allocation3 + $0xb8] sm:$0xff]
    %v1351 = vld [vmem:[#allocation3 + $0xc0] sm:$0xff]
    %v1352 = vld [vmem:[#allocation3 + $0xc8] sm:$0xff]
    %v1353 = vld [vmem:[#allocation3 + $0xd0] sm:$0xff]
    %v1354 = vld [vmem:[#allocation3 + $0xd8] sm:$0xff]
    %v1355 = vld [vmem:[#allocation3 + $0xe0] sm:$0xff]
    %v1356 = vld [vmem:[#allocation3 + $0xe8] sm:$0xff]
    %v1357 = vld [vmem:[#allocation3 + $0xf0] sm:$0xff]
    %v1358 = vld [vmem:[#allocation3 + $0xf8] sm:$0xff]
    %v1359 = vld [vmem:[#allocation3 + $0x100] sm:$0xff]
    %v1360 = vld [vmem:[#allocation3 + $0x108] sm:$0xff]
    %v1361 = vld [vmem:[#allocation3 + $0x110] sm:$0xff]
    %v1362 = vld [vmem:[#allocation3 + $0x118] sm:$0xff]
    %v1364 = vsel %vm714, %v1326, 0
    %1366 = vmatpush.msra.mxu0 0.0
    %1367 = vmatpush.msra.mxu0 0.0
    %1368 = vmatpush.msra.mxu0 0.0
    %1369 = vmatpush.msra.mxu0 0.0
    %1370 = vmatpush.msra.mxu0 0.0
    %1371 = vmatpush.msra.mxu0 0.0
    %1372 = vmatpush.msra.mxu0 0.0
    %1373 = vmatpush.msra.mxu0 %v1359
    %1374 = vmatpush.msra.mxu0 %v1355
    %1375 = vmatpush.msra.mxu0 %v1351
    %1376 = vmatpush.msra.mxu0 %v1347
    %1377 = vmatpush.msra.mxu0 %v1343
    %1378 = vmatpush.msra.mxu0 %v1339
    %1379 = vmatpush.msra.mxu0 %v1335
    %1380 = vmatpush.msra.mxu0 %v1331
    %1381 = vmatpush.msra.mxu0 %v1327
    %1382 = vmatmul.f32.gmra.mxu0 %v1364
    %v1383 = vpop.f32.mrf.mxu0
    %v1384 = vadd.f32 0.0, %v1383
    %1385 = vdwg.mxu0
    %1386 = vmatpush.msra.mxu0 0.0
    %1387 = vmatpush.msra.mxu0 0.0
    %1388 = vmatpush.msra.mxu0 0.0
    %1389 = vmatpush.msra.mxu0 0.0
    %1390 = vmatpush.msra.mxu0 0.0
    %1391 = vmatpush.msra.mxu0 0.0
    %1392 = vmatpush.msra.mxu0 0.0
    %1393 = vmatpush.msra.mxu0 %v1360
    %1394 = vmatpush.msra.mxu0 %v1356
    %1395 = vmatpush.msra.mxu0 %v1352
    %1396 = vmatpush.msra.mxu0 %v1348
    %1397 = vmatpush.msra.mxu0 %v1344
    %1398 = vmatpush.msra.mxu0 %v1340
    %1399 = vmatpush.msra.mxu0 %v1336
    %1400 = vmatpush.msra.mxu0 %v1332
    %1401 = vmatpush.msra.mxu0 %v1328
    %1402 = vmatmul.f32.gmra.mxu0 %v1364
    %v1403 = vpop.f32.mrf.mxu0
    %v1404 = vadd.f32 0.0, %v1403
    %1405 = vdwg.mxu0
    %1406 = vmatpush.msra.mxu0 0.0
    %1407 = vmatpush.msra.mxu0 0.0
    %1408 = vmatpush.msra.mxu0 0.0
    %1409 = vmatpush.msra.mxu0 0.0
    %1410 = vmatpush.msra.mxu0 0.0
    %1411 = vmatpush.msra.mxu0 0.0
    %1412 = vmatpush.msra.mxu0 0.0
    %1413 = vmatpush.msra.mxu0 %v1361
    %1414 = vmatpush.msra.mxu0 %v1357
    %1415 = vmatpush.msra.mxu0 %v1353
    %1416 = vmatpush.msra.mxu0 %v1349
    %1417 = vmatpush.msra.mxu0 %v1345
    %1418 = vmatpush.msra.mxu0 %v1341
    %1419 = vmatpush.msra.mxu0 %v1337
    %1420 = vmatpush.msra.mxu0 %v1333
    %1421 = vmatpush.msra.mxu0 %v1329
    %1422 = vmatmul.f32.gmra.mxu0 %v1364
    %v1423 = vpop.f32.mrf.mxu0
    %v1424 = vadd.f32 0.0, %v1423
    %1425 = vdwg.mxu0
    %1426 = vmatpush.msra.mxu0 0.0
    %1427 = vmatpush.msra.mxu0 0.0
    %1428 = vmatpush.msra.mxu0 0.0
    %1429 = vmatpush.msra.mxu0 0.0
    %1430 = vmatpush.msra.mxu0 0.0
    %1431 = vmatpush.msra.mxu0 0.0
    %1432 = vmatpush.msra.mxu0 0.0
    %1433 = vmatpush.msra.mxu0 %v1362
    %1434 = vmatpush.msra.mxu0 %v1358
    %1435 = vmatpush.msra.mxu0 %v1354
    %1436 = vmatpush.msra.mxu0 %v1350
    %1437 = vmatpush.msra.mxu0 %v1346
    %1438 = vmatpush.msra.mxu0 %v1342
    %1439 = vmatpush.msra.mxu0 %v1338
    %1440 = vmatpush.msra.mxu0 %v1334
    %1441 = vmatpush.msra.mxu0 %v1330
    %1442 = vmatmul.f32.gmra.mxu0 %v1364
    %v1443 = vpop.f32.mrf.mxu0
    %v1444 = vadd.f32 0.0, %v1443
    %1445 = vdwg.mxu0
    %v1446 = vld [vmem:[%s8] sm:$0xf]
    %1448 = vset.pattern.permute.xlu0 0
    %1449 = vperm.xlu0 %1448, %v1446
    %v1450 = vpop.permute.xlu0 %1449
    %v1452 = vmul.f32 %v1384, %v1450
    %v1453 = vmul.f32 %v1404, %v1450
    %v1454 = vmul.f32 %v1424, %v1450
    %v1455 = vmul.f32 %v1444, %v1450
    %v1456 = vld [vmem:[%s9] sm:$0xf]
    %1458 = vset.pattern.permute.xlu0 0
    %1459 = vperm.xlu0 %1458, %v1456
    %v1460 = vpop.permute.xlu0 %1459
    %v1462 = vadd.f32 %v1452, %v1460
    %v1463 = vadd.f32 %v1453, %v1460
    %v1464 = vadd.f32 %v1454, %v1460
    %v1465 = vadd.f32 %v1455, %v1460
    %v1466 = vmax.f32 %v1462, 0.0
    %v1467 = vmax.f32 %v1463, 0.0
    %v1468 = vmax.f32 %v1464, 0.0
    %v1469 = vmax.f32 %v1465, 0.0
    %v1474 = vrot.slane %v1467, 4
    %v1475 = vrot.slane %v1469, 4
    %vm1476 = vcmask 1043456
    %v1477 = vsel %vm1476, %v1466, %v1474
    %v1478 = vsel %vm1476, %v1468, %v1475
    %1481 = vst [vmem:[#allocation10] sm:$0xff] %v1477
    %1482 = vst [vmem:[#allocation10 + $0x8] sm:$0xff] %v1478
    // Predicated region
    $region54: #{tpu_custom_call.1} parent=1 // pred_check
      _
    $region55: #{tpu_custom_call.1} parent=1 // pred_check_branch
      %1484 = sbr.rel (0) target = $region57
    $region56: #{tpu_custom_call.1} parent=1 // pred_region
      %1486 = vsyncadd [#allocation6], 0
      %s1488 = sshll.u32 [#allocation10], 4
      %s1489 = int_to_ptr.vmem [resolvable:$true] %s1488
      %s1490 = sshll.u32 %s10, 4
      %s1491 = int_to_ptr.hbm [resolvable:$true] %s1490
      %1493 = dma.vmem_to_hbm [thread:$0]  %s1489, 256, %s1491, [#allocation6]
    $region57: #{tpu_custom_call.1} parent=1 // pred_fallthru
      _
    // Predicated region
    $region58: #{tpu_custom_call.1} parent=1 // pred_check
      _
    $region59: #{tpu_custom_call.1} parent=1 // pred_check_branch
      %1495 = sbr.rel (0) target = $region61
    $region60: #{tpu_custom_call.1} parent=1 // pred_region
      %1497 = dma.done [#allocation6], 256
    $region61: #{tpu_custom_call.1} parent=1 // pred_fallthru
      _
    %1498 = vsyncpa [#allocation5], 1
    %1499 = vsyncpa [#allocation8], 1
    %1500 = vsyncpa [#allocation6], 1

</llo_original>
